<compile_context>
chip_gen: v5e
topology: v5e:2x2
jax: 0.10.0
libtpu: 0.0.40
codegen_flags: <defaults>
</compile_context>

<pallas_src>
import math

import jax
import jax.numpy as jnp
from jax import lax
from jax.experimental import pallas as pl
from jax.experimental.pallas import tpu as pltpu

# ---- small demo configuration (consistent with the module's forward) ----
B = 2            # batch size
S = 8            # sequence_length
IN_DIM = 9       # input_dim
IN_PAD = 128     # zero-padded input feature dim (lane aligned)
D = 128          # d_model
H = 8            # nhead
DH = D // H      # head dim
F = 256          # dim_feedforward (reduced from 1024 for the small demo)
L = 2            # num_layers      (reduced from 4 for the small demo)
T = B * S        # total tokens per call
HT = H * T       # head-expanded attention width
HP = 128         # head axis padded to a full lane tile for the denom matmuls
LN_EPS = 1e-5    # PyTorch LayerNorm default eps
NEG_BIG = -1e30  # additive mask for cross-batch attention columns


def _layer_norm(v, g, b):
    mu = jnp.mean(v, axis=-1, keepdims=True)
    var = jnp.mean((v - mu) ** 2, axis=-1, keepdims=True)
    return (v - mu) * lax.rsqrt(var + LN_EPS) * g + b


def _mm(a, w_bf16):
    # bf16 x bf16 into the MXU, f32 accumulate.  Only the MXU operands are
    # rounded; all elementwise math stays f32 (v5e has no bf16 VPU/EUP).
    return jnp.dot(a.astype(jnp.bfloat16), w_bf16,
                   preferred_element_type=jnp.float32)


def transformer_kernel(x_ref, wproj_ref, pos_ref,
                       wqkv_ref, bqkv_ref, wo_ref, bo_ref,
                       g1_ref, b1_ref, w1_ref, bw1_ref,
                       w2_ref, bw2_ref, g2_ref, b2_ref,
                       gn_ref, bn_ref,
                       vmask_ref, bias_ref, ones_ge_ref, ones_hd_ref,
                       out_ref):
    f32 = jnp.float32
    NT = (((1,), (1,)), ((), ()))          # contract last dims: q @ kexp^T

    vmask = vmask_ref[...]                 # (HT, D)  block-diagonal 0/1
    bias = bias_ref[...]                   # (T, HT)  cross-batch -1e30 mask
    ones_ge = ones_ge_ref[...]             # (HT, HP) column -> head one-hot
    ones_hd = ones_hd_ref[...]             # (HP, D)  head   -> feature one-hot

    # ---- input projection (bias + positional embeddings pre-folded) ----
    x = _mm(x_ref[...], wproj_ref[...]) + pos_ref[...]           # (T, D) f32

    # TODO(synk): dropout (p=0.2) omitted -- eval-mode forward (identity).
    for l in range(L):   # demo L=2 unrolled; switch to lax.fori_loop at L=4
        # ---- multi-head self attention (post-norm encoder layer) ----
        qkv = _mm(x, wqkv_ref[l]) + bqkv_ref[l]                  # (T, 3D)
        q = qkv[:, 0:D]                    # 1/sqrt(DH) already folded in
        k = qkv[:, D:2 * D]
        v = qkv[:, 2 * D:3 * D]

        # Head-expanded block-diagonal layout (sublane tiling, no transposes):
        #   kexp[h*T + j, d] = k[j, d]  iff feature d belongs to head h
        kexp = jnp.concatenate([k] * H, axis=0) * vmask          # (HT, D)
        vexp = jnp.concatenate([v] * H, axis=0) * vmask          # (HT, D)

        # scores[t, h*T + j] = q_h[t] . k_h[j]  (pre-scaled), NT contraction.
        scores = lax.dot_general(q, kexp, NT, preferred_element_type=f32) + bias
        # Shared per-row max is exact for every head group (see guard below).
        e = jnp.exp(scores - jnp.max(scores, axis=-1, keepdims=True))  # (T, HT)

        # Unnormalized attention + per-(row, head) softmax denominator, then
        # normalize after the matmul (identical math for block-diagonal vexp).
        attn_u = jnp.dot(e, vexp, preferred_element_type=f32)         # (T, D)
        denom_h = jnp.dot(e, ones_ge, preferred_element_type=f32)     # (T, HP)
        denom = jnp.dot(denom_h, ones_hd, preferred_element_type=f32) # (T, D)
        denom = jnp.maximum(denom, 1e-20)   # NaN guard for underflowed heads
        attn = attn_u * pl.reciprocal(denom, approx=True)

        attn = _mm(attn, wo_ref[l]) + bo_ref[l]
        x = _layer_norm(x + attn, g1_ref[l], b1_ref[l])

        # ---- feed forward (Linear -> ReLU -> Linear) ----
        hid = jnp.maximum(_mm(x, w1_ref[l]) + bw1_ref[l], 0.0)
        ff = _mm(hid, w2_ref[l]) + bw2_ref[l]
        x = _layer_norm(x + ff, g2_ref[l], b2_ref[l])

    # ---- AdaptiveAvgPool1d(1) + final LayerNorm; lane-dense (B, D) store ----
    pooled = jnp.mean(x.reshape(B, S, D), axis=1)                # (B, D)
    out_ref[...] = _layer_norm(pooled, gn_ref[...], bn_ref[...])


def init_params(key):
    """Deterministic PyTorch-style initialization (uniform +/- 1/sqrt(fan_in))."""
    keys = iter(jax.random.split(key, 64))

    def uni(shape, fan_in):
        bnd = 1.0 / math.sqrt(fan_in)
        return jax.random.uniform(next(keys), shape, jnp.float32, -bnd, bnd)

    def stack(fn):
        return jnp.stack([fn() for _ in range(L)], axis=0)

    p = {}
    p['wproj'] = uni((D, IN_DIM), IN_DIM)
    p['bproj'] = uni((1, D), IN_DIM)
    p['pos'] = jax.random.normal(next(keys), (S, D), jnp.float32)
    p['wqkv'] = stack(lambda: uni((3 * D, D), D))
    p['bqkv'] = stack(lambda: uni((1, 3 * D), D))
    p['wo'] = stack(lambda: uni((D, D), D))
    p['bo'] = stack(lambda: uni((1, D), D))
    p['g1'] = jnp.ones((L, 1, D), jnp.float32)
    p['b1'] = jnp.zeros((L, 1, D), jnp.float32)
    p['w1'] = stack(lambda: uni((F, D), D))
    p['bw1'] = stack(lambda: uni((1, F), D))
    p['w2'] = stack(lambda: uni((D, F), F))
    p['bw2'] = stack(lambda: uni((1, D), F))
    p['g2'] = jnp.ones((L, 1, D), jnp.float32)
    p['b2'] = jnp.zeros((L, 1, D), jnp.float32)
    p['gn'] = jnp.ones((1, D), jnp.float32)
    p['bn'] = jnp.zeros((1, D), jnp.float32)
    return p


def _pack_args(x, params):
    """Host/XLA-side layout prep (done once under jit, outside the kernel):
    flatten + zero-pad the input, pre-transpose every weight so the kernel only
    does x @ w, fold the attention scale into the q weights/bias and the input
    bias into the tiled positional embeddings, cast matmul weights to bf16, and
    build the block-diagonal attention structure constants."""
    bf16 = jnp.bfloat16
    f32 = jnp.float32
    scale = 1.0 / math.sqrt(DH)

    x_flat = x.reshape(T, IN_DIM).astype(f32)
    x_pad = jnp.zeros((T, IN_PAD), f32).at[:, :IN_DIM].set(x_flat)

    wprojT = (jnp.zeros((IN_PAD, D), f32)
              .at[:IN_DIM, :].set(params['wproj'].T).astype(bf16))
    # positional embeddings tiled to (T, D) with the input-proj bias folded in
    pos_tiled = (jnp.tile(params['pos'], (B, 1)) + params['bproj']).astype(f32)

    # qkv: transpose to (L, D, 3D) and fold 1/sqrt(DH) into the q columns.
    wqkvT = jnp.transpose(params['wqkv'], (0, 2, 1))
    wqkvT = wqkvT.at[:, :, :D].multiply(scale).astype(bf16)
    bqkv = params['bqkv'].at[:, :, :D].multiply(scale)

    woT = jnp.transpose(params['wo'], (0, 2, 1)).astype(bf16)     # (L, D, D)
    w1T = jnp.transpose(params['w1'], (0, 2, 1)).astype(bf16)     # (L, D, F)
    w2T = jnp.transpose(params['w2'], (0, 2, 1)).astype(bf16)     # (L, F, D)

    # ---- attention structure constants (tiny, host-built, DMA'd once) ----
    col = jnp.arange(HT)                     # c = h*T + j
    feat = jnp.arange(D)
    tok = jnp.arange(T)
    head = jnp.arange(HP)
    # block-diagonal 0/1 mask: row c belongs to head c//T, feature d to d//DH
    vmask = (col[:, None] // T == feat[None, :] // DH).astype(f32)       # (HT, D)
    # cross-batch key columns get a large negative additive bias
    bias = jnp.where(tok[:, None] // S == (col[None, :] % T) // S,
                     0.0, NEG_BIG).astype(f32)                           # (T, HT)
    # column -> head one-hot (padded to 128 lanes) and head -> feature one-hot
    ones_ge = (col[:, None] // T == head[None, :]).astype(f32)           # (HT, HP)
    ones_hd = (head[:, None] == feat[None, :] // DH).astype(f32)         # (HP, D)

    return (x_pad, wprojT, pos_tiled,
            wqkvT, bqkv, woT, params['bo'],
            params['g1'], params['b1'], w1T, params['bw1'],
            w2T, params['bw2'], params['g2'], params['b2'],
            params['gn'], params['bn'],
            vmask, bias, ones_ge, ones_hd)


@jax.jit
def pallas_forward(x, params):
    args = _pack_args(x, params)
    pooled = pl.pallas_call(
        transformer_kernel,
        out_shape=jax.ShapeDtypeStruct((B, D), jnp.float32),
        in_specs=[pl.BlockSpec(memory_space=pltpu.MemorySpace.VMEM)] * len(args),
        out_specs=pl.BlockSpec(memory_space=pltpu.MemorySpace.VMEM),
    )(*args)
    # Lane-dense kernel store; the tiny 2-column head selection lives here.
    mean = pooled[:, 0:1]
    var = jax.nn.softplus(pooled[:, 1:2]) + 1e-6
    # TODO(synk): self.output = nn.Linear(d_model, 2) is defined but never used
    # in the module's forward(); faithfully not applied.
    return jnp.concatenate([mean, var], axis=-1)


@jax.jit
def ref_forward(x, params):
    """Pure-JAX reference with naive per-batch / per-head f32 attention
    (independent of the kernel's block-diagonal formulation), sharing the same
    packed bf16 weights and bf16-MXU linear layers."""
    (x_pad, wprojT, pos_t, wqkvT, bqkv, woT, bo,
     g1, b1, w1T, bw1, w2T, bw2, g2, b2, gn, bn,
     _vmask, _bias, _ones_ge, _ones_hd) = _pack_args(x, params)

    xv = _mm(x_pad, wprojT) + pos_t
    for l in range(L):
        qkv = _mm(xv, wqkvT[l]) + bqkv[l]
        q, k, v = qkv[:, :D], qkv[:, D:2 * D], qkv[:, 2 * D:]
        rows = []
        for bb in range(B):
            r0 = bb * S
            qb, kb, vb = q[r0:r0 + S], k[r0:r0 + S], v[r0:r0 + S]
            heads = []
            for hh in range(H):
                c0 = hh * DH
                s = qb[:, c0:c0 + DH] @ kb[:, c0:c0 + DH].T   # scale pre-folded
                p = jax.nn.softmax(s, axis=-1)
                heads.append(p @ vb[:, c0:c0 + DH])
            rows.append(jnp.concatenate(heads, axis=-1))
        attn = _mm(jnp.concatenate(rows, axis=0), woT[l]) + bo[l]
        xv = _layer_norm(xv + attn, g1[l], b1[l])
        hid = jnp.maximum(_mm(xv, w1T[l]) + bw1[l], 0.0)
        xv = _layer_norm(xv + _mm(hid, w2T[l]) + bw2[l], g2[l], b2[l])

    pooled = _layer_norm(jnp.mean(xv.reshape(B, S, D), axis=1), gn, bn)
    mean = pooled[:, 0:1]
    var = jax.nn.softplus(pooled[:, 1:2]) + 1e-6
    return jnp.concatenate([mean, var], axis=-1)


if __name__ == "__main__":
    key = jax.random.PRNGKey(0)
    kp, kx = jax.random.split(key)
    params = init_params(kp)
    x = jax.random.normal(kx, (B, S, IN_DIM), jnp.float32)

    out = pallas_forward(x, params)
    jax.block_until_ready(out)
    assert out.shape == (B, 2)

    ref = ref_forward(x, params)
    if not jnp.allclose(out, ref, atol=1e-2, rtol=1e-2):
        raise AssertionError(f"Pallas kernel mismatch:\n{out}\nvs reference\n{ref}")

    print("KERNEL_OK")
</pallas_src>

<mosaic_0001>
module attributes {stable_mosaic.version = 11 : i64} {
  func.func @transformer_kernel(%arg0: memref<16x128xf32, #tpu.memory_space<vmem>>, %arg1: memref<128x128xbf16, #tpu.memory_space<vmem>>, %arg2: memref<16x128xf32, #tpu.memory_space<vmem>>, %arg3: memref<2x128x384xbf16, #tpu.memory_space<vmem>>, %arg4: memref<2x1x384xf32, #tpu.memory_space<vmem>>, %arg5: memref<2x128x128xbf16, #tpu.memory_space<vmem>>, %arg6: memref<2x1x128xf32, #tpu.memory_space<vmem>>, %arg7: memref<2x1x128xf32, #tpu.memory_space<vmem>>, %arg8: memref<2x1x128xf32, #tpu.memory_space<vmem>>, %arg9: memref<2x128x256xbf16, #tpu.memory_space<vmem>>, %arg10: memref<2x1x256xf32, #tpu.memory_space<vmem>>, %arg11: memref<2x256x128xbf16, #tpu.memory_space<vmem>>, %arg12: memref<2x1x128xf32, #tpu.memory_space<vmem>>, %arg13: memref<2x1x128xf32, #tpu.memory_space<vmem>>, %arg14: memref<2x1x128xf32, #tpu.memory_space<vmem>>, %arg15: memref<1x128xf32, #tpu.memory_space<vmem>>, %arg16: memref<1x128xf32, #tpu.memory_space<vmem>>, %arg17: memref<128x128xf32, #tpu.memory_space<vmem>>, %arg18: memref<16x128xf32, #tpu.memory_space<vmem>>, %arg19: memref<128x128xf32, #tpu.memory_space<vmem>>, %arg20: memref<128x128xf32, #tpu.memory_space<vmem>>, %arg21: memref<2x128xf32, #tpu.memory_space<vmem>>) attributes {dimension_semantics = [], scalar_prefetch = 0 : i64, scratch_operands = 0 : i64, tpu.core_type = #tpu.core_type<tc>} {
    %c0 = arith.constant 0 : index
    %c0_0 = arith.constant 0 : index
    %0 = vector.load %arg17[%c0, %c0_0] : memref<128x128xf32, #tpu.memory_space<vmem>>, vector<128x128xf32>
    %c0_1 = arith.constant 0 : index
    %c0_2 = arith.constant 0 : index
    %1 = vector.load %arg18[%c0_1, %c0_2] : memref<16x128xf32, #tpu.memory_space<vmem>>, vector<16x128xf32>
    %c0_3 = arith.constant 0 : index
    %c0_4 = arith.constant 0 : index
    %2 = vector.load %arg19[%c0_3, %c0_4] : memref<128x128xf32, #tpu.memory_space<vmem>>, vector<128x128xf32>
    %c0_5 = arith.constant 0 : index
    %c0_6 = arith.constant 0 : index
    %3 = vector.load %arg20[%c0_5, %c0_6] : memref<128x128xf32, #tpu.memory_space<vmem>>, vector<128x128xf32>
    %c0_7 = arith.constant 0 : index
    %c0_8 = arith.constant 0 : index
    %4 = vector.load %arg0[%c0_7, %c0_8] : memref<16x128xf32, #tpu.memory_space<vmem>>, vector<16x128xf32>
    %c0_9 = arith.constant 0 : index
    %c0_10 = arith.constant 0 : index
    %5 = vector.load %arg1[%c0_9, %c0_10] : memref<128x128xbf16, #tpu.memory_space<vmem>>, vector<128x128xbf16>
    %6 = arith.truncf %4 : vector<16x128xf32> to vector<16x128xbf16>
    %cst = arith.constant dense<0.000000e+00> : vector<16x128xf32>
    %7 = tpu.matmul %6, %5, %cst {dimension_numbers = #tpu.dot_dimension_numbers<[1], [0], [0], [1], [0, 0, 1, 1], [], []>} : vector<16x128xbf16>, vector<128x128xbf16>, vector<16x128xf32> -> vector<16x128xf32>
    %c0_11 = arith.constant 0 : index
    %c0_12 = arith.constant 0 : index
    %8 = vector.load %arg2[%c0_11, %c0_12] : memref<16x128xf32, #tpu.memory_space<vmem>>, vector<16x128xf32>
    %9 = arith.addf %7, %8 : vector<16x128xf32>
    %c0_13 = arith.constant 0 : index
    %c0_14 = arith.constant 0 : index
    %c0_15 = arith.constant 0 : index
    %10 = vector.load %arg3[%c0_13, %c0_14, %c0_15] : memref<2x128x384xbf16, #tpu.memory_space<vmem>>, vector<1x128x384xbf16>
    %11 = vector.shape_cast %10 : vector<1x128x384xbf16> to vector<128x384xbf16>
    %12 = arith.truncf %9 : vector<16x128xf32> to vector<16x128xbf16>
    %cst_16 = arith.constant dense<0.000000e+00> : vector<16x384xf32>
    %13 = tpu.matmul %12, %11, %cst_16 {dimension_numbers = #tpu.dot_dimension_numbers<[1], [0], [0], [1], [0, 0, 1, 1], [], []>} : vector<16x128xbf16>, vector<128x384xbf16>, vector<16x384xf32> -> vector<16x384xf32>
    %c0_17 = arith.constant 0 : index
    %c0_18 = arith.constant 0 : index
    %c0_19 = arith.constant 0 : index
    %14 = vector.load %arg4[%c0_17, %c0_18, %c0_19] : memref<2x1x384xf32, #tpu.memory_space<vmem>>, vector<1x1x384xf32>
    %15 = vector.shape_cast %14 : vector<1x1x384xf32> to vector<1x384xf32>
    %16 = vector.broadcast %15 : vector<1x384xf32> to vector<16x384xf32>
    %17 = arith.addf %13, %16 : vector<16x384xf32>
    %18 = vector.extract_strided_slice %17 {offsets = [0, 0], sizes = [16, 128], strides = [1, 1]} : vector<16x384xf32> to vector<16x128xf32>
    %19 = vector.extract_strided_slice %17 {offsets = [0, 128], sizes = [16, 128], strides = [1, 1]} : vector<16x384xf32> to vector<16x128xf32>
    %20 = vector.extract_strided_slice %17 {offsets = [0, 256], sizes = [16, 128], strides = [1, 1]} : vector<16x384xf32> to vector<16x128xf32>
    %21 = tpu.concatenate %19, %19, %19, %19, %19, %19, %19, %19 in 0 : vector<16x128xf32>, vector<16x128xf32>, vector<16x128xf32>, vector<16x128xf32>, vector<16x128xf32>, vector<16x128xf32>, vector<16x128xf32>, vector<16x128xf32> -> vector<128x128xf32>
    %22 = arith.mulf %21, %0 : vector<128x128xf32>
    %23 = tpu.concatenate %20, %20, %20, %20, %20, %20, %20, %20 in 0 : vector<16x128xf32>, vector<16x128xf32>, vector<16x128xf32>, vector<16x128xf32>, vector<16x128xf32>, vector<16x128xf32>, vector<16x128xf32>, vector<16x128xf32> -> vector<128x128xf32>
    %24 = arith.mulf %23, %0 : vector<128x128xf32>
    %cst_20 = arith.constant dense<0.000000e+00> : vector<16x128xf32>
    %25 = tpu.matmul %18, %22, %cst_20 {dimension_numbers = #tpu.dot_dimension_numbers<[1], [1], [0], [0], [0, 0, 1, 0], [], []>} : vector<16x128xf32>, vector<128x128xf32>, vector<16x128xf32> -> vector<16x128xf32>
    %26 = arith.addf %25, %1 : vector<16x128xf32>
    %cst_21 = arith.constant dense<0xFF800000> : vector<16xf32>
    %27 = vector.multi_reduction <maximumf>, %26, %cst_21 [1] : vector<16x128xf32> to vector<16xf32>
    %28 = vector.shape_cast %27 : vector<16xf32> to vector<16x1xf32>
    %29 = vector.broadcast %28 : vector<16x1xf32> to vector<16x128xf32>
    %30 = arith.subf %26, %29 : vector<16x128xf32>
    %31 = math.exp %30 : vector<16x128xf32>
    %cst_22 = arith.constant dense<0.000000e+00> : vector<16x128xf32>
    %32 = tpu.matmul %31, %24, %cst_22 {dimension_numbers = #tpu.dot_dimension_numbers<[1], [0], [0], [1], [0, 0, 1, 1], [], []>} : vector<16x128xf32>, vector<128x128xf32>, vector<16x128xf32> -> vector<16x128xf32>
    %cst_23 = arith.constant dense<0.000000e+00> : vector<16x128xf32>
    %33 = tpu.matmul %31, %2, %cst_23 {dimension_numbers = #tpu.dot_dimension_numbers<[1], [0], [0], [1], [0, 0, 1, 1], [], []>} : vector<16x128xf32>, vector<128x128xf32>, vector<16x128xf32> -> vector<16x128xf32>
    %cst_24 = arith.constant dense<0.000000e+00> : vector<16x128xf32>
    %34 = tpu.matmul %33, %3, %cst_24 {dimension_numbers = #tpu.dot_dimension_numbers<[1], [0], [0], [1], [0, 0, 1, 1], [], []>} : vector<16x128xf32>, vector<128x128xf32>, vector<16x128xf32> -> vector<16x128xf32>
    %cst_25 = arith.constant 9.99999968E-21 : f32
    %35 = vector.broadcast %cst_25 : f32 to vector<16x128xf32>
    %36 = arith.maximumf %34, %35 : vector<16x128xf32>
    %37 = tpu.reciprocal %36 {approx = true} : vector<16x128xf32> -> vector<16x128xf32>
    %38 = arith.mulf %32, %37 : vector<16x128xf32>
    %c0_26 = arith.constant 0 : index
    %c0_27 = arith.constant 0 : index
    %c0_28 = arith.constant 0 : index
    %39 = vector.load %arg5[%c0_26, %c0_27, %c0_28] : memref<2x128x128xbf16, #tpu.memory_space<vmem>>, vector<1x128x128xbf16>
    %40 = vector.shape_cast %39 : vector<1x128x128xbf16> to vector<128x128xbf16>
    %41 = arith.truncf %38 : vector<16x128xf32> to vector<16x128xbf16>
    %cst_29 = arith.constant dense<0.000000e+00> : vector<16x128xf32>
    %42 = tpu.matmul %41, %40, %cst_29 {dimension_numbers = #tpu.dot_dimension_numbers<[1], [0], [0], [1], [0, 0, 1, 1], [], []>} : vector<16x128xbf16>, vector<128x128xbf16>, vector<16x128xf32> -> vector<16x128xf32>
    %c0_30 = arith.constant 0 : index
    %c0_31 = arith.constant 0 : index
    %c0_32 = arith.constant 0 : index
    %43 = vector.load %arg6[%c0_30, %c0_31, %c0_32] : memref<2x1x128xf32, #tpu.memory_space<vmem>>, vector<1x1x128xf32>
    %44 = vector.shape_cast %43 : vector<1x1x128xf32> to vector<1x128xf32>
    %45 = vector.broadcast %44 : vector<1x128xf32> to vector<16x128xf32>
    %46 = arith.addf %42, %45 : vector<16x128xf32>
    %47 = arith.addf %9, %46 : vector<16x128xf32>
    %c0_33 = arith.constant 0 : index
    %c0_34 = arith.constant 0 : index
    %c0_35 = arith.constant 0 : index
    %48 = vector.load %arg7[%c0_33, %c0_34, %c0_35] : memref<2x1x128xf32, #tpu.memory_space<vmem>>, vector<1x1x128xf32>
    %49 = vector.shape_cast %48 : vector<1x1x128xf32> to vector<1x128xf32>
    %c0_36 = arith.constant 0 : index
    %c0_37 = arith.constant 0 : index
    %c0_38 = arith.constant 0 : index
    %50 = vector.load %arg8[%c0_36, %c0_37, %c0_38] : memref<2x1x128xf32, #tpu.memory_space<vmem>>, vector<1x1x128xf32>
    %51 = vector.shape_cast %50 : vector<1x1x128xf32> to vector<1x128xf32>
    %cst_39 = arith.constant dense<0.000000e+00> : vector<16xf32>
    %52 = vector.multi_reduction <add>, %47, %cst_39 [1] : vector<16x128xf32> to vector<16xf32>
    %53 = vector.shape_cast %52 : vector<16xf32> to vector<16x1xf32>
    %cst_40 = arith.constant 1.280000e+02 : f32
    %54 = vector.broadcast %cst_40 : f32 to vector<16x1xf32>
    %55 = arith.divf %53, %54 : vector<16x1xf32>
    %56 = vector.broadcast %55 : vector<16x1xf32> to vector<16x128xf32>
    %57 = arith.subf %47, %56 : vector<16x128xf32>
    %58 = arith.mulf %57, %57 : vector<16x128xf32>
    %cst_41 = arith.constant dense<0.000000e+00> : vector<16xf32>
    %59 = vector.multi_reduction <add>, %58, %cst_41 [1] : vector<16x128xf32> to vector<16xf32>
    %60 = vector.shape_cast %59 : vector<16xf32> to vector<16x1xf32>
    %cst_42 = arith.constant 1.280000e+02 : f32
    %61 = vector.broadcast %cst_42 : f32 to vector<16x1xf32>
    %62 = arith.divf %60, %61 : vector<16x1xf32>
    %63 = vector.broadcast %55 : vector<16x1xf32> to vector<16x128xf32>
    %64 = arith.subf %47, %63 : vector<16x128xf32>
    %cst_43 = arith.constant 9.99999974E-6 : f32
    %65 = vector.broadcast %cst_43 : f32 to vector<16x1xf32>
    %66 = arith.addf %62, %65 : vector<16x1xf32>
    %67 = math.rsqrt %66 : vector<16x1xf32>
    %68 = vector.broadcast %67 : vector<16x1xf32> to vector<16x128xf32>
    %69 = arith.mulf %64, %68 : vector<16x128xf32>
    %70 = vector.broadcast %49 : vector<1x128xf32> to vector<16x128xf32>
    %71 = arith.mulf %69, %70 : vector<16x128xf32>
    %72 = vector.broadcast %51 : vector<1x128xf32> to vector<16x128xf32>
    %73 = arith.addf %71, %72 : vector<16x128xf32>
    %c0_44 = arith.constant 0 : index
    %c0_45 = arith.constant 0 : index
    %c0_46 = arith.constant 0 : index
    %74 = vector.load %arg9[%c0_44, %c0_45, %c0_46] : memref<2x128x256xbf16, #tpu.memory_space<vmem>>, vector<1x128x256xbf16>
    %75 = vector.shape_cast %74 : vector<1x128x256xbf16> to vector<128x256xbf16>
    %76 = arith.truncf %73 : vector<16x128xf32> to vector<16x128xbf16>
    %cst_47 = arith.constant dense<0.000000e+00> : vector<16x256xf32>
    %77 = tpu.matmul %76, %75, %cst_47 {dimension_numbers = #tpu.dot_dimension_numbers<[1], [0], [0], [1], [0, 0, 1, 1], [], []>} : vector<16x128xbf16>, vector<128x256xbf16>, vector<16x256xf32> -> vector<16x256xf32>
    %c0_48 = arith.constant 0 : index
    %c0_49 = arith.constant 0 : index
    %c0_50 = arith.constant 0 : index
    %78 = vector.load %arg10[%c0_48, %c0_49, %c0_50] : memref<2x1x256xf32, #tpu.memory_space<vmem>>, vector<1x1x256xf32>
    %79 = vector.shape_cast %78 : vector<1x1x256xf32> to vector<1x256xf32>
    %80 = vector.broadcast %79 : vector<1x256xf32> to vector<16x256xf32>
    %81 = arith.addf %77, %80 : vector<16x256xf32>
    %cst_51 = arith.constant 0.000000e+00 : f32
    %82 = vector.broadcast %cst_51 : f32 to vector<16x256xf32>
    %83 = arith.maximumf %81, %82 : vector<16x256xf32>
    %c0_52 = arith.constant 0 : index
    %c0_53 = arith.constant 0 : index
    %c0_54 = arith.constant 0 : index
    %84 = vector.load %arg11[%c0_52, %c0_53, %c0_54] : memref<2x256x128xbf16, #tpu.memory_space<vmem>>, vector<1x256x128xbf16>
    %85 = vector.shape_cast %84 : vector<1x256x128xbf16> to vector<256x128xbf16>
    %86 = arith.truncf %83 : vector<16x256xf32> to vector<16x256xbf16>
    %cst_55 = arith.constant dense<0.000000e+00> : vector<16x128xf32>
    %87 = tpu.matmul %86, %85, %cst_55 {dimension_numbers = #tpu.dot_dimension_numbers<[1], [0], [0], [1], [0, 0, 1, 1], [], []>} : vector<16x256xbf16>, vector<256x128xbf16>, vector<16x128xf32> -> vector<16x128xf32>
    %c0_56 = arith.constant 0 : index
    %c0_57 = arith.constant 0 : index
    %c0_58 = arith.constant 0 : index
    %88 = vector.load %arg12[%c0_56, %c0_57, %c0_58] : memref<2x1x128xf32, #tpu.memory_space<vmem>>, vector<1x1x128xf32>
    %89 = vector.shape_cast %88 : vector<1x1x128xf32> to vector<1x128xf32>
    %90 = vector.broadcast %89 : vector<1x128xf32> to vector<16x128xf32>
    %91 = arith.addf %87, %90 : vector<16x128xf32>
    %92 = arith.addf %73, %91 : vector<16x128xf32>
    %c0_59 = arith.constant 0 : index
    %c0_60 = arith.constant 0 : index
    %c0_61 = arith.constant 0 : index
    %93 = vector.load %arg13[%c0_59, %c0_60, %c0_61] : memref<2x1x128xf32, #tpu.memory_space<vmem>>, vector<1x1x128xf32>
    %94 = vector.shape_cast %93 : vector<1x1x128xf32> to vector<1x128xf32>
    %c0_62 = arith.constant 0 : index
    %c0_63 = arith.constant 0 : index
    %c0_64 = arith.constant 0 : index
    %95 = vector.load %arg14[%c0_62, %c0_63, %c0_64] : memref<2x1x128xf32, #tpu.memory_space<vmem>>, vector<1x1x128xf32>
    %96 = vector.shape_cast %95 : vector<1x1x128xf32> to vector<1x128xf32>
    %cst_65 = arith.constant dense<0.000000e+00> : vector<16xf32>
    %97 = vector.multi_reduction <add>, %92, %cst_65 [1] : vector<16x128xf32> to vector<16xf32>
    %98 = vector.shape_cast %97 : vector<16xf32> to vector<16x1xf32>
    %cst_66 = arith.constant 1.280000e+02 : f32
    %99 = vector.broadcast %cst_66 : f32 to vector<16x1xf32>
    %100 = arith.divf %98, %99 : vector<16x1xf32>
    %101 = vector.broadcast %100 : vector<16x1xf32> to vector<16x128xf32>
    %102 = arith.subf %92, %101 : vector<16x128xf32>
    %103 = arith.mulf %102, %102 : vector<16x128xf32>
    %cst_67 = arith.constant dense<0.000000e+00> : vector<16xf32>
    %104 = vector.multi_reduction <add>, %103, %cst_67 [1] : vector<16x128xf32> to vector<16xf32>
    %105 = vector.shape_cast %104 : vector<16xf32> to vector<16x1xf32>
    %cst_68 = arith.constant 1.280000e+02 : f32
    %106 = vector.broadcast %cst_68 : f32 to vector<16x1xf32>
    %107 = arith.divf %105, %106 : vector<16x1xf32>
    %108 = vector.broadcast %100 : vector<16x1xf32> to vector<16x128xf32>
    %109 = arith.subf %92, %108 : vector<16x128xf32>
    %cst_69 = arith.constant 9.99999974E-6 : f32
    %110 = vector.broadcast %cst_69 : f32 to vector<16x1xf32>
    %111 = arith.addf %107, %110 : vector<16x1xf32>
    %112 = math.rsqrt %111 : vector<16x1xf32>
    %113 = vector.broadcast %112 : vector<16x1xf32> to vector<16x128xf32>
    %114 = arith.mulf %109, %113 : vector<16x128xf32>
    %115 = vector.broadcast %94 : vector<1x128xf32> to vector<16x128xf32>
    %116 = arith.mulf %114, %115 : vector<16x128xf32>
    %117 = vector.broadcast %96 : vector<1x128xf32> to vector<16x128xf32>
    %118 = arith.addf %116, %117 : vector<16x128xf32>
    %c1 = arith.constant 1 : index
    %c0_70 = arith.constant 0 : index
    %c0_71 = arith.constant 0 : index
    %119 = vector.load %arg3[%c1, %c0_70, %c0_71] : memref<2x128x384xbf16, #tpu.memory_space<vmem>>, vector<1x128x384xbf16>
    %120 = vector.shape_cast %119 : vector<1x128x384xbf16> to vector<128x384xbf16>
    %121 = arith.truncf %118 : vector<16x128xf32> to vector<16x128xbf16>
    %cst_72 = arith.constant dense<0.000000e+00> : vector<16x384xf32>
    %122 = tpu.matmul %121, %120, %cst_72 {dimension_numbers = #tpu.dot_dimension_numbers<[1], [0], [0], [1], [0, 0, 1, 1], [], []>} : vector<16x128xbf16>, vector<128x384xbf16>, vector<16x384xf32> -> vector<16x384xf32>
    %c1_73 = arith.constant 1 : index
    %c0_74 = arith.constant 0 : index
    %c0_75 = arith.constant 0 : index
    %123 = vector.load %arg4[%c1_73, %c0_74, %c0_75] : memref<2x1x384xf32, #tpu.memory_space<vmem>>, vector<1x1x384xf32>
    %124 = vector.shape_cast %123 : vector<1x1x384xf32> to vector<1x384xf32>
    %125 = vector.broadcast %124 : vector<1x384xf32> to vector<16x384xf32>
    %126 = arith.addf %122, %125 : vector<16x384xf32>
    %127 = vector.extract_strided_slice %126 {offsets = [0, 0], sizes = [16, 128], strides = [1, 1]} : vector<16x384xf32> to vector<16x128xf32>
    %128 = vector.extract_strided_slice %126 {offsets = [0, 128], sizes = [16, 128], strides = [1, 1]} : vector<16x384xf32> to vector<16x128xf32>
    %129 = vector.extract_strided_slice %126 {offsets = [0, 256], sizes = [16, 128], strides = [1, 1]} : vector<16x384xf32> to vector<16x128xf32>
    %130 = tpu.concatenate %128, %128, %128, %128, %128, %128, %128, %128 in 0 : vector<16x128xf32>, vector<16x128xf32>, vector<16x128xf32>, vector<16x128xf32>, vector<16x128xf32>, vector<16x128xf32>, vector<16x128xf32>, vector<16x128xf32> -> vector<128x128xf32>
    %131 = arith.mulf %130, %0 : vector<128x128xf32>
    %132 = tpu.concatenate %129, %129, %129, %129, %129, %129, %129, %129 in 0 : vector<16x128xf32>, vector<16x128xf32>, vector<16x128xf32>, vector<16x128xf32>, vector<16x128xf32>, vector<16x128xf32>, vector<16x128xf32>, vector<16x128xf32> -> vector<128x128xf32>
    %133 = arith.mulf %132, %0 : vector<128x128xf32>
    %cst_76 = arith.constant dense<0.000000e+00> : vector<16x128xf32>
    %134 = tpu.matmul %127, %131, %cst_76 {dimension_numbers = #tpu.dot_dimension_numbers<[1], [1], [0], [0], [0, 0, 1, 0], [], []>} : vector<16x128xf32>, vector<128x128xf32>, vector<16x128xf32> -> vector<16x128xf32>
    %135 = arith.addf %134, %1 : vector<16x128xf32>
    %cst_77 = arith.constant dense<0xFF800000> : vector<16xf32>
    %136 = vector.multi_reduction <maximumf>, %135, %cst_77 [1] : vector<16x128xf32> to vector<16xf32>
    %137 = vector.shape_cast %136 : vector<16xf32> to vector<16x1xf32>
    %138 = vector.broadcast %137 : vector<16x1xf32> to vector<16x128xf32>
    %139 = arith.subf %135, %138 : vector<16x128xf32>
    %140 = math.exp %139 : vector<16x128xf32>
    %cst_78 = arith.constant dense<0.000000e+00> : vector<16x128xf32>
    %141 = tpu.matmul %140, %133, %cst_78 {dimension_numbers = #tpu.dot_dimension_numbers<[1], [0], [0], [1], [0, 0, 1, 1], [], []>} : vector<16x128xf32>, vector<128x128xf32>, vector<16x128xf32> -> vector<16x128xf32>
    %cst_79 = arith.constant dense<0.000000e+00> : vector<16x128xf32>
    %142 = tpu.matmul %140, %2, %cst_79 {dimension_numbers = #tpu.dot_dimension_numbers<[1], [0], [0], [1], [0, 0, 1, 1], [], []>} : vector<16x128xf32>, vector<128x128xf32>, vector<16x128xf32> -> vector<16x128xf32>
    %cst_80 = arith.constant dense<0.000000e+00> : vector<16x128xf32>
    %143 = tpu.matmul %142, %3, %cst_80 {dimension_numbers = #tpu.dot_dimension_numbers<[1], [0], [0], [1], [0, 0, 1, 1], [], []>} : vector<16x128xf32>, vector<128x128xf32>, vector<16x128xf32> -> vector<16x128xf32>
    %cst_81 = arith.constant 9.99999968E-21 : f32
    %144 = vector.broadcast %cst_81 : f32 to vector<16x128xf32>
    %145 = arith.maximumf %143, %144 : vector<16x128xf32>
    %146 = tpu.reciprocal %145 {approx = true} : vector<16x128xf32> -> vector<16x128xf32>
    %147 = arith.mulf %141, %146 : vector<16x128xf32>
    %c1_82 = arith.constant 1 : index
    %c0_83 = arith.constant 0 : index
    %c0_84 = arith.constant 0 : index
    %148 = vector.load %arg5[%c1_82, %c0_83, %c0_84] : memref<2x128x128xbf16, #tpu.memory_space<vmem>>, vector<1x128x128xbf16>
    %149 = vector.shape_cast %148 : vector<1x128x128xbf16> to vector<128x128xbf16>
    %150 = arith.truncf %147 : vector<16x128xf32> to vector<16x128xbf16>
    %cst_85 = arith.constant dense<0.000000e+00> : vector<16x128xf32>
    %151 = tpu.matmul %150, %149, %cst_85 {dimension_numbers = #tpu.dot_dimension_numbers<[1], [0], [0], [1], [0, 0, 1, 1], [], []>} : vector<16x128xbf16>, vector<128x128xbf16>, vector<16x128xf32> -> vector<16x128xf32>
    %c1_86 = arith.constant 1 : index
    %c0_87 = arith.constant 0 : index
    %c0_88 = arith.constant 0 : index
    %152 = vector.load %arg6[%c1_86, %c0_87, %c0_88] : memref<2x1x128xf32, #tpu.memory_space<vmem>>, vector<1x1x128xf32>
    %153 = vector.shape_cast %152 : vector<1x1x128xf32> to vector<1x128xf32>
    %154 = vector.broadcast %153 : vector<1x128xf32> to vector<16x128xf32>
    %155 = arith.addf %151, %154 : vector<16x128xf32>
    %156 = arith.addf %118, %155 : vector<16x128xf32>
    %c1_89 = arith.constant 1 : index
    %c0_90 = arith.constant 0 : index
    %c0_91 = arith.constant 0 : index
    %157 = vector.load %arg7[%c1_89, %c0_90, %c0_91] : memref<2x1x128xf32, #tpu.memory_space<vmem>>, vector<1x1x128xf32>
    %158 = vector.shape_cast %157 : vector<1x1x128xf32> to vector<1x128xf32>
    %c1_92 = arith.constant 1 : index
    %c0_93 = arith.constant 0 : index
    %c0_94 = arith.constant 0 : index
    %159 = vector.load %arg8[%c1_92, %c0_93, %c0_94] : memref<2x1x128xf32, #tpu.memory_space<vmem>>, vector<1x1x128xf32>
    %160 = vector.shape_cast %159 : vector<1x1x128xf32> to vector<1x128xf32>
    %cst_95 = arith.constant dense<0.000000e+00> : vector<16xf32>
    %161 = vector.multi_reduction <add>, %156, %cst_95 [1] : vector<16x128xf32> to vector<16xf32>
    %162 = vector.shape_cast %161 : vector<16xf32> to vector<16x1xf32>
    %cst_96 = arith.constant 1.280000e+02 : f32
    %163 = vector.broadcast %cst_96 : f32 to vector<16x1xf32>
    %164 = arith.divf %162, %163 : vector<16x1xf32>
    %165 = vector.broadcast %164 : vector<16x1xf32> to vector<16x128xf32>
    %166 = arith.subf %156, %165 : vector<16x128xf32>
    %167 = arith.mulf %166, %166 : vector<16x128xf32>
    %cst_97 = arith.constant dense<0.000000e+00> : vector<16xf32>
    %168 = vector.multi_reduction <add>, %167, %cst_97 [1] : vector<16x128xf32> to vector<16xf32>
    %169 = vector.shape_cast %168 : vector<16xf32> to vector<16x1xf32>
    %cst_98 = arith.constant 1.280000e+02 : f32
    %170 = vector.broadcast %cst_98 : f32 to vector<16x1xf32>
    %171 = arith.divf %169, %170 : vector<16x1xf32>
    %172 = vector.broadcast %164 : vector<16x1xf32> to vector<16x128xf32>
    %173 = arith.subf %156, %172 : vector<16x128xf32>
    %cst_99 = arith.constant 9.99999974E-6 : f32
    %174 = vector.broadcast %cst_99 : f32 to vector<16x1xf32>
    %175 = arith.addf %171, %174 : vector<16x1xf32>
    %176 = math.rsqrt %175 : vector<16x1xf32>
    %177 = vector.broadcast %176 : vector<16x1xf32> to vector<16x128xf32>
    %178 = arith.mulf %173, %177 : vector<16x128xf32>
    %179 = vector.broadcast %158 : vector<1x128xf32> to vector<16x128xf32>
    %180 = arith.mulf %178, %179 : vector<16x128xf32>
    %181 = vector.broadcast %160 : vector<1x128xf32> to vector<16x128xf32>
    %182 = arith.addf %180, %181 : vector<16x128xf32>
    %c1_100 = arith.constant 1 : index
    %c0_101 = arith.constant 0 : index
    %c0_102 = arith.constant 0 : index
    %183 = vector.load %arg9[%c1_100, %c0_101, %c0_102] : memref<2x128x256xbf16, #tpu.memory_space<vmem>>, vector<1x128x256xbf16>
    %184 = vector.shape_cast %183 : vector<1x128x256xbf16> to vector<128x256xbf16>
    %185 = arith.truncf %182 : vector<16x128xf32> to vector<16x128xbf16>
    %cst_103 = arith.constant dense<0.000000e+00> : vector<16x256xf32>
    %186 = tpu.matmul %185, %184, %cst_103 {dimension_numbers = #tpu.dot_dimension_numbers<[1], [0], [0], [1], [0, 0, 1, 1], [], []>} : vector<16x128xbf16>, vector<128x256xbf16>, vector<16x256xf32> -> vector<16x256xf32>
    %c1_104 = arith.constant 1 : index
    %c0_105 = arith.constant 0 : index
    %c0_106 = arith.constant 0 : index
    %187 = vector.load %arg10[%c1_104, %c0_105, %c0_106] : memref<2x1x256xf32, #tpu.memory_space<vmem>>, vector<1x1x256xf32>
    %188 = vector.shape_cast %187 : vector<1x1x256xf32> to vector<1x256xf32>
    %189 = vector.broadcast %188 : vector<1x256xf32> to vector<16x256xf32>
    %190 = arith.addf %186, %189 : vector<16x256xf32>
    %cst_107 = arith.constant 0.000000e+00 : f32
    %191 = vector.broadcast %cst_107 : f32 to vector<16x256xf32>
    %192 = arith.maximumf %190, %191 : vector<16x256xf32>
    %c1_108 = arith.constant 1 : index
    %c0_109 = arith.constant 0 : index
    %c0_110 = arith.constant 0 : index
    %193 = vector.load %arg11[%c1_108, %c0_109, %c0_110] : memref<2x256x128xbf16, #tpu.memory_space<vmem>>, vector<1x256x128xbf16>
    %194 = vector.shape_cast %193 : vector<1x256x128xbf16> to vector<256x128xbf16>
    %195 = arith.truncf %192 : vector<16x256xf32> to vector<16x256xbf16>
    %cst_111 = arith.constant dense<0.000000e+00> : vector<16x128xf32>
    %196 = tpu.matmul %195, %194, %cst_111 {dimension_numbers = #tpu.dot_dimension_numbers<[1], [0], [0], [1], [0, 0, 1, 1], [], []>} : vector<16x256xbf16>, vector<256x128xbf16>, vector<16x128xf32> -> vector<16x128xf32>
    %c1_112 = arith.constant 1 : index
    %c0_113 = arith.constant 0 : index
    %c0_114 = arith.constant 0 : index
    %197 = vector.load %arg12[%c1_112, %c0_113, %c0_114] : memref<2x1x128xf32, #tpu.memory_space<vmem>>, vector<1x1x128xf32>
    %198 = vector.shape_cast %197 : vector<1x1x128xf32> to vector<1x128xf32>
    %199 = vector.broadcast %198 : vector<1x128xf32> to vector<16x128xf32>
    %200 = arith.addf %196, %199 : vector<16x128xf32>
    %201 = arith.addf %182, %200 : vector<16x128xf32>
    %c1_115 = arith.constant 1 : index
    %c0_116 = arith.constant 0 : index
    %c0_117 = arith.constant 0 : index
    %202 = vector.load %arg13[%c1_115, %c0_116, %c0_117] : memref<2x1x128xf32, #tpu.memory_space<vmem>>, vector<1x1x128xf32>
    %203 = vector.shape_cast %202 : vector<1x1x128xf32> to vector<1x128xf32>
    %c1_118 = arith.constant 1 : index
    %c0_119 = arith.constant 0 : index
    %c0_120 = arith.constant 0 : index
    %204 = vector.load %arg14[%c1_118, %c0_119, %c0_120] : memref<2x1x128xf32, #tpu.memory_space<vmem>>, vector<1x1x128xf32>
    %205 = vector.shape_cast %204 : vector<1x1x128xf32> to vector<1x128xf32>
    %cst_121 = arith.constant dense<0.000000e+00> : vector<16xf32>
    %206 = vector.multi_reduction <add>, %201, %cst_121 [1] : vector<16x128xf32> to vector<16xf32>
    %207 = vector.shape_cast %206 : vector<16xf32> to vector<16x1xf32>
    %cst_122 = arith.constant 1.280000e+02 : f32
    %208 = vector.broadcast %cst_122 : f32 to vector<16x1xf32>
    %209 = arith.divf %207, %208 : vector<16x1xf32>
    %210 = vector.broadcast %209 : vector<16x1xf32> to vector<16x128xf32>
    %211 = arith.subf %201, %210 : vector<16x128xf32>
    %212 = arith.mulf %211, %211 : vector<16x128xf32>
    %cst_123 = arith.constant dense<0.000000e+00> : vector<16xf32>
    %213 = vector.multi_reduction <add>, %212, %cst_123 [1] : vector<16x128xf32> to vector<16xf32>
    %214 = vector.shape_cast %213 : vector<16xf32> to vector<16x1xf32>
    %cst_124 = arith.constant 1.280000e+02 : f32
    %215 = vector.broadcast %cst_124 : f32 to vector<16x1xf32>
    %216 = arith.divf %214, %215 : vector<16x1xf32>
    %217 = vector.broadcast %209 : vector<16x1xf32> to vector<16x128xf32>
    %218 = arith.subf %201, %217 : vector<16x128xf32>
    %cst_125 = arith.constant 9.99999974E-6 : f32
    %219 = vector.broadcast %cst_125 : f32 to vector<16x1xf32>
    %220 = arith.addf %216, %219 : vector<16x1xf32>
    %221 = math.rsqrt %220 : vector<16x1xf32>
    %222 = vector.broadcast %221 : vector<16x1xf32> to vector<16x128xf32>
    %223 = arith.mulf %218, %222 : vector<16x128xf32>
    %224 = vector.broadcast %203 : vector<1x128xf32> to vector<16x128xf32>
    %225 = arith.mulf %223, %224 : vector<16x128xf32>
    %226 = vector.broadcast %205 : vector<1x128xf32> to vector<16x128xf32>
    %227 = arith.addf %225, %226 : vector<16x128xf32>
    %228 = vector.shape_cast %227 : vector<16x128xf32> to vector<2x8x128xf32>
    %cst_126 = arith.constant dense<0.000000e+00> : vector<2x128xf32>
    %229 = vector.multi_reduction <add>, %228, %cst_126 [1] : vector<2x8x128xf32> to vector<2x128xf32>
    %cst_127 = arith.constant 8.000000e+00 : f32
    %230 = vector.broadcast %cst_127 : f32 to vector<2x128xf32>
    %231 = arith.divf %229, %230 : vector<2x128xf32>
    %c0_128 = arith.constant 0 : index
    %c0_129 = arith.constant 0 : index
    %232 = vector.load %arg15[%c0_128, %c0_129] : memref<1x128xf32, #tpu.memory_space<vmem>>, vector<1x128xf32>
    %c0_130 = arith.constant 0 : index
    %c0_131 = arith.constant 0 : index
    %233 = vector.load %arg16[%c0_130, %c0_131] : memref<1x128xf32, #tpu.memory_space<vmem>>, vector<1x128xf32>
    %cst_132 = arith.constant dense<0.000000e+00> : vector<2xf32>
    %234 = vector.multi_reduction <add>, %231, %cst_132 [1] : vector<2x128xf32> to vector<2xf32>
    %235 = vector.shape_cast %234 : vector<2xf32> to vector<2x1xf32>
    %cst_133 = arith.constant 1.280000e+02 : f32
    %236 = vector.broadcast %cst_133 : f32 to vector<2x1xf32>
    %237 = arith.divf %235, %236 : vector<2x1xf32>
    %238 = vector.broadcast %237 : vector<2x1xf32> to vector<2x128xf32>
    %239 = arith.subf %231, %238 : vector<2x128xf32>
    %240 = arith.mulf %239, %239 : vector<2x128xf32>
    %cst_134 = arith.constant dense<0.000000e+00> : vector<2xf32>
    %241 = vector.multi_reduction <add>, %240, %cst_134 [1] : vector<2x128xf32> to vector<2xf32>
    %242 = vector.shape_cast %241 : vector<2xf32> to vector<2x1xf32>
    %cst_135 = arith.constant 1.280000e+02 : f32
    %243 = vector.broadcast %cst_135 : f32 to vector<2x1xf32>
    %244 = arith.divf %242, %243 : vector<2x1xf32>
    %245 = vector.broadcast %237 : vector<2x1xf32> to vector<2x128xf32>
    %246 = arith.subf %231, %245 : vector<2x128xf32>
    %cst_136 = arith.constant 9.99999974E-6 : f32
    %247 = vector.broadcast %cst_136 : f32 to vector<2x1xf32>
    %248 = arith.addf %244, %247 : vector<2x1xf32>
    %249 = math.rsqrt %248 : vector<2x1xf32>
    %250 = vector.broadcast %249 : vector<2x1xf32> to vector<2x128xf32>
    %251 = arith.mulf %246, %250 : vector<2x128xf32>
    %252 = vector.broadcast %232 : vector<1x128xf32> to vector<2x128xf32>
    %253 = arith.mulf %251, %252 : vector<2x128xf32>
    %254 = vector.broadcast %233 : vector<1x128xf32> to vector<2x128xf32>
    %255 = arith.addf %253, %254 : vector<2x128xf32>
    %c0_137 = arith.constant 0 : index
    %c0_138 = arith.constant 0 : index
    %256 = vector.load %arg21[%c0_137, %c0_138] : memref<2x128xf32, #tpu.memory_space<vmem>>, vector<2x128xf32>
    tpu.vector_store %arg21[%c0_137, %c0_138], %255 {strides = array<i32>} : memref<2x128xf32, #tpu.memory_space<vmem>>, vector<2x128xf32>,
    return
  }
}

</mosaic_0001>

<llo_original>
// kernel: pallas_forward.1
$region0: #{pallas_forward.1}
  #allocation0 [shape = 'u32[]', space=smem, size = 0x4, offset = 0x4, fixed_abs, tag = 'smem constant byte address 0x4 - core index']
  #allocation1 [shape = 'u32[72,128]{1,0:T(1,128)}', space=vmem, size = 0x9000, scoped, tag = 'internal scratch']
  %s0 = inlined_call_operand.vmem [shape: f32[16,128], index: 0, kind: input, shape index: {}]
  %s1 = inlined_call_operand.vmem [shape: bf16[128,128], index: 1, kind: input, shape index: {}]
  %s2 = inlined_call_operand.vmem [shape: f32[16,128], index: 2, kind: input, shape index: {}]
  %s3 = inlined_call_operand.vmem [shape: bf16[2,128,384], index: 3, kind: input, shape index: {}]
  %s4 = inlined_call_operand.vmem [shape: f32[2,1,384], index: 4, kind: input, shape index: {}]
  %s5 = inlined_call_operand.vmem [shape: bf16[2,128,128], index: 5, kind: input, shape index: {}]
  %s6 = inlined_call_operand.vmem [shape: f32[2,1,128], index: 6, kind: input, shape index: {}]
  %s7 = inlined_call_operand.vmem [shape: f32[2,1,128], index: 7, kind: input, shape index: {}]
  %s8 = inlined_call_operand.vmem [shape: f32[2,1,128], index: 8, kind: input, shape index: {}]
  %s9 = inlined_call_operand.vmem [shape: bf16[2,128,256], index: 9, kind: input, shape index: {}]
  %s10 = inlined_call_operand.vmem [shape: f32[2,1,256], index: 10, kind: input, shape index: {}]
  %s11 = inlined_call_operand.vmem [shape: bf16[2,256,128], index: 11, kind: input, shape index: {}]
  %s12 = inlined_call_operand.vmem [shape: f32[2,1,128], index: 12, kind: input, shape index: {}]
  %s13 = inlined_call_operand.vmem [shape: f32[2,1,128], index: 13, kind: input, shape index: {}]
  %s14 = inlined_call_operand.vmem [shape: f32[2,1,128], index: 14, kind: input, shape index: {}]
  %s15 = inlined_call_operand.vmem [shape: f32[1,128], index: 15, kind: input, shape index: {}]
  %s16 = inlined_call_operand.vmem [shape: f32[1,128], index: 16, kind: input, shape index: {}]
  %s17 = inlined_call_operand.vmem [shape: f32[128,128], index: 17, kind: input, shape index: {}]
  %s18 = inlined_call_operand.vmem [shape: f32[16,128], index: 18, kind: input, shape index: {}]
  %s19 = inlined_call_operand.vmem [shape: f32[128,128], index: 19, kind: input, shape index: {}]
  %s20 = inlined_call_operand.vmem [shape: f32[128,128], index: 20, kind: input, shape index: {}]
  %s21 = inlined_call_operand.vmem [shape: f32[2,128], index: 21, kind: output, shape index: {}]
  %s22 = sld [smem:[#allocation0]]
  $region94: #{pallas_forward.1} parent=0
    _
  %s24 = ssub.s32 1, %s22
  %s25 = scalar_select 0, %s24, %s22
  // Predicated region
  $region2: #{pallas_forward.1} parent=0 // pred_check
    _
  $region3: #{pallas_forward.1} parent=0 // pred_check_branch
    %27 = sbr.rel (0) target = $region5
  $region4: #{pallas_forward.1} parent=0 // pred_region
    _
  $region5: #{pallas_forward.1} parent=0 // pred_fallthru
    _
  // Predicated region
  $region6: #{pallas_forward.1} parent=0 // pred_check
    _
  $region7: #{pallas_forward.1} parent=0 // pred_check_branch
    %29 = sbr.rel (0) target = $region9
  $region8: #{pallas_forward.1} parent=0 // pred_region
    _
  $region9: #{pallas_forward.1} parent=0 // pred_fallthru
    _
  // Predicated region
  $region10: #{pallas_forward.1} parent=0 // pred_check
    _
  $region11: #{pallas_forward.1} parent=0 // pred_check_branch
    %31 = sbr.rel (0) target = $region13
  $region12: #{pallas_forward.1} parent=0 // pred_region
    _
  $region13: #{pallas_forward.1} parent=0 // pred_fallthru
    _
  // Predicated region
  $region14: #{pallas_forward.1} parent=0 // pred_check
    _
  $region15: #{pallas_forward.1} parent=0 // pred_check_branch
    %33 = sbr.rel (0) target = $region17
  $region16: #{pallas_forward.1} parent=0 // pred_region
    _
  $region17: #{pallas_forward.1} parent=0 // pred_fallthru
    _
  // Predicated region
  $region18: #{pallas_forward.1} parent=0 // pred_check
    _
  $region19: #{pallas_forward.1} parent=0 // pred_check_branch
    %35 = sbr.rel (0) target = $region21
  $region20: #{pallas_forward.1} parent=0 // pred_region
    _
  $region21: #{pallas_forward.1} parent=0 // pred_fallthru
    _
  // Predicated region
  $region22: #{pallas_forward.1} parent=0 // pred_check
    _
  $region23: #{pallas_forward.1} parent=0 // pred_check_branch
    %37 = sbr.rel (0) target = $region25
  $region24: #{pallas_forward.1} parent=0 // pred_region
    _
  $region25: #{pallas_forward.1} parent=0 // pred_fallthru
    _
  // Predicated region
  $region26: #{pallas_forward.1} parent=0 // pred_check
    _
  $region27: #{pallas_forward.1} parent=0 // pred_check_branch
    %39 = sbr.rel (0) target = $region29
  $region28: #{pallas_forward.1} parent=0 // pred_region
    _
  $region29: #{pallas_forward.1} parent=0 // pred_fallthru
    _
  // Predicated region
  $region30: #{pallas_forward.1} parent=0 // pred_check
    _
  $region31: #{pallas_forward.1} parent=0 // pred_check_branch
    %41 = sbr.rel (0) target = $region33
  $region32: #{pallas_forward.1} parent=0 // pred_region
    _
  $region33: #{pallas_forward.1} parent=0 // pred_fallthru
    _
  // Predicated region
  $region34: #{pallas_forward.1} parent=0 // pred_check
    _
  $region35: #{pallas_forward.1} parent=0 // pred_check_branch
    %43 = sbr.rel (0) target = $region37
  $region36: #{pallas_forward.1} parent=0 // pred_region
    _
  $region37: #{pallas_forward.1} parent=0 // pred_fallthru
    _
  // Predicated region
  $region38: #{pallas_forward.1} parent=0 // pred_check
    _
  $region39: #{pallas_forward.1} parent=0 // pred_check_branch
    %45 = sbr.rel (0) target = $region41
  $region40: #{pallas_forward.1} parent=0 // pred_region
    _
  $region41: #{pallas_forward.1} parent=0 // pred_fallthru
    _
  // Predicated region
  $region42: #{pallas_forward.1} parent=0 // pred_check
    _
  $region43: #{pallas_forward.1} parent=0 // pred_check_branch
    %47 = sbr.rel (0) target = $region45
  $region44: #{pallas_forward.1} parent=0 // pred_region
    _
  $region45: #{pallas_forward.1} parent=0 // pred_fallthru
    _
  // Predicated region
  $region46: #{pallas_forward.1} parent=0 // pred_check
    _
  $region47: #{pallas_forward.1} parent=0 // pred_check_branch
    %49 = sbr.rel (0) target = $region49
  $region48: #{pallas_forward.1} parent=0 // pred_region
    _
  $region49: #{pallas_forward.1} parent=0 // pred_fallthru
    _
  // Predicated region
  $region50: #{pallas_forward.1} parent=0 // pred_check
    _
  $region51: #{pallas_forward.1} parent=0 // pred_check_branch
    %51 = sbr.rel (0) target = $region53
  $region52: #{pallas_forward.1} parent=0 // pred_region
    _
  $region53: #{pallas_forward.1} parent=0 // pred_fallthru
    _
  // Predicated region
  $region54: #{pallas_forward.1} parent=0 // pred_check
    _
  $region55: #{pallas_forward.1} parent=0 // pred_check_branch
    %53 = sbr.rel (0) target = $region57
  $region56: #{pallas_forward.1} parent=0 // pred_region
    _
  $region57: #{pallas_forward.1} parent=0 // pred_fallthru
    _
  // Predicated region
  $region58: #{pallas_forward.1} parent=0 // pred_check
    _
  $region59: #{pallas_forward.1} parent=0 // pred_check_branch
    %55 = sbr.rel (0) target = $region61
  $region60: #{pallas_forward.1} parent=0 // pred_region
    _
  $region61: #{pallas_forward.1} parent=0 // pred_fallthru
    _
  // Predicated region
  $region62: #{pallas_forward.1} parent=0 // pred_check
    _
  $region63: #{pallas_forward.1} parent=0 // pred_check_branch
    %57 = sbr.rel (0) target = $region65
  $region64: #{pallas_forward.1} parent=0 // pred_region
    _
  $region65: #{pallas_forward.1} parent=0 // pred_fallthru
    _
  // Predicated region
  $region66: #{pallas_forward.1} parent=0 // pred_check
    _
  $region67: #{pallas_forward.1} parent=0 // pred_check_branch
    %59 = sbr.rel (0) target = $region69
  $region68: #{pallas_forward.1} parent=0 // pred_region
    _
  $region69: #{pallas_forward.1} parent=0 // pred_fallthru
    _
  // Predicated region
  $region70: #{pallas_forward.1} parent=0 // pred_check
    _
  $region71: #{pallas_forward.1} parent=0 // pred_check_branch
    %61 = sbr.rel (0) target = $region73
  $region72: #{pallas_forward.1} parent=0 // pred_region
    _
  $region73: #{pallas_forward.1} parent=0 // pred_fallthru
    _
  // Predicated region
  $region74: #{pallas_forward.1} parent=0 // pred_check
    _
  $region75: #{pallas_forward.1} parent=0 // pred_check_branch
    %63 = sbr.rel (0) target = $region77
  $region76: #{pallas_forward.1} parent=0 // pred_region
    _
  $region77: #{pallas_forward.1} parent=0 // pred_fallthru
    _
  // Predicated region
  $region78: #{pallas_forward.1} parent=0 // pred_check
    _
  $region79: #{pallas_forward.1} parent=0 // pred_check_branch
    %65 = sbr.rel (0) target = $region81
  $region80: #{pallas_forward.1} parent=0 // pred_region
    _
  $region81: #{pallas_forward.1} parent=0 // pred_fallthru
    _
  // Predicated region
  $region82: #{pallas_forward.1} parent=0 // pred_check
    _
  $region83: #{pallas_forward.1} parent=0 // pred_check_branch
    %67 = sbr.rel (0) target = $region85
  $region84: #{pallas_forward.1} parent=0 // pred_region
    _
  $region85: #{pallas_forward.1} parent=0 // pred_fallthru
    _
  %v68 = vld [vmem:[%s17] sm:$0xff]
  %v69 = vld [vmem:[%s17 + $0x8] sm:$0xff]
  %v70 = vld [vmem:[%s17 + $0x10] sm:$0xff]
  %v71 = vld [vmem:[%s17 + $0x18] sm:$0xff]
  %v72 = vld [vmem:[%s17 + $0x20] sm:$0xff]
  %v73 = vld [vmem:[%s17 + $0x28] sm:$0xff]
  %v74 = vld [vmem:[%s17 + $0x30] sm:$0xff]
  %v75 = vld [vmem:[%s17 + $0x38] sm:$0xff]
  %v76 = vld [vmem:[%s17 + $0x40] sm:$0xff]
  %v77 = vld [vmem:[%s17 + $0x48] sm:$0xff]
  %v78 = vld [vmem:[%s17 + $0x50] sm:$0xff]
  %v79 = vld [vmem:[%s17 + $0x58] sm:$0xff]
  %v80 = vld [vmem:[%s17 + $0x60] sm:$0xff]
  %v81 = vld [vmem:[%s17 + $0x68] sm:$0xff]
  %v82 = vld [vmem:[%s17 + $0x70] sm:$0xff]
  %v83 = vld [vmem:[%s17 + $0x78] sm:$0xff]
  %v84 = vld [vmem:[%s18] sm:$0xff]
  %v85 = vld [vmem:[%s18 + $0x8] sm:$0xff]
  %v86 = vld [vmem:[%s19] sm:$0xff]
  %v87 = vld [vmem:[%s19 + $0x8] sm:$0xff]
  %v88 = vld [vmem:[%s19 + $0x10] sm:$0xff]
  %v89 = vld [vmem:[%s19 + $0x18] sm:$0xff]
  %v90 = vld [vmem:[%s19 + $0x20] sm:$0xff]
  %v91 = vld [vmem:[%s19 + $0x28] sm:$0xff]
  %v92 = vld [vmem:[%s19 + $0x30] sm:$0xff]
  %v93 = vld [vmem:[%s19 + $0x38] sm:$0xff]
  %v94 = vld [vmem:[%s19 + $0x40] sm:$0xff]
  %v95 = vld [vmem:[%s19 + $0x48] sm:$0xff]
  %v96 = vld [vmem:[%s19 + $0x50] sm:$0xff]
  %v97 = vld [vmem:[%s19 + $0x58] sm:$0xff]
  %v98 = vld [vmem:[%s19 + $0x60] sm:$0xff]
  %v99 = vld [vmem:[%s19 + $0x68] sm:$0xff]
  %v100 = vld [vmem:[%s19 + $0x70] sm:$0xff]
  %v101 = vld [vmem:[%s19 + $0x78] sm:$0xff]
  %v102 = vld [vmem:[%s20] sm:$0xff]
  %v103 = vld [vmem:[%s20 + $0x8] sm:$0xff]
  %v104 = vld [vmem:[%s20 + $0x10] sm:$0xff]
  %v105 = vld [vmem:[%s20 + $0x18] sm:$0xff]
  %v106 = vld [vmem:[%s20 + $0x20] sm:$0xff]
  %v107 = vld [vmem:[%s20 + $0x28] sm:$0xff]
  %v108 = vld [vmem:[%s20 + $0x30] sm:$0xff]
  %v109 = vld [vmem:[%s20 + $0x38] sm:$0xff]
  %v110 = vld [vmem:[%s20 + $0x40] sm:$0xff]
  %v111 = vld [vmem:[%s20 + $0x48] sm:$0xff]
  %v112 = vld [vmem:[%s20 + $0x50] sm:$0xff]
  %v113 = vld [vmem:[%s20 + $0x58] sm:$0xff]
  %v114 = vld [vmem:[%s20 + $0x60] sm:$0xff]
  %v115 = vld [vmem:[%s20 + $0x68] sm:$0xff]
  %v116 = vld [vmem:[%s20 + $0x70] sm:$0xff]
  %v117 = vld [vmem:[%s20 + $0x78] sm:$0xff]
  %v118 = vld [vmem:[%s0] sm:$0xff]
  %v119 = vld [vmem:[%s0 + $0x8] sm:$0xff]
  %v120 = vld [vmem:[%s1] sm:$0xf]
  %v121 = vld [vmem:[%s1 + $0x4] sm:$0xf]
  %v122 = vld [vmem:[%s1 + $0x8] sm:$0xf]
  %v123 = vld [vmem:[%s1 + $0xc] sm:$0xf]
  %v124 = vld [vmem:[%s1 + $0x10] sm:$0xf]
  %v125 = vld [vmem:[%s1 + $0x14] sm:$0xf]
  %v126 = vld [vmem:[%s1 + $0x18] sm:$0xf]
  %v127 = vld [vmem:[%s1 + $0x1c] sm:$0xf]
  %v128 = vld [vmem:[%s1 + $0x20] sm:$0xf]
  %v129 = vld [vmem:[%s1 + $0x24] sm:$0xf]
  %v130 = vld [vmem:[%s1 + $0x28] sm:$0xf]
  %v131 = vld [vmem:[%s1 + $0x2c] sm:$0xf]
  %v132 = vld [vmem:[%s1 + $0x30] sm:$0xf]
  %v133 = vld [vmem:[%s1 + $0x34] sm:$0xf]
  %v134 = vld [vmem:[%s1 + $0x38] sm:$0xf]
  %v135 = vld [vmem:[%s1 + $0x3c] sm:$0xf]
  %v136 = vpack.c.bf16 %v119, %v118
  %v137 = vld [vmem:[%s2] sm:$0xff]
  %v138 = vld [vmem:[%s2 + $0x8] sm:$0xff]
  %v155 = vunpack.c.l.b16 %v120
  %v156 = vunpack.c.l.b16 %v121
  %v157 = vunpack.c.l.b16 %v122
  %v158 = vunpack.c.l.b16 %v123
  %v159 = vunpack.c.l.b16 %v124
  %v160 = vunpack.c.l.b16 %v125
  %v161 = vunpack.c.l.b16 %v126
  %v162 = vunpack.c.l.b16 %v127
  %v163 = vunpack.c.l.b16 %v128
  %v164 = vunpack.c.l.b16 %v129
  %v165 = vunpack.c.l.b16 %v130
  %v166 = vunpack.c.l.b16 %v131
  %v167 = vunpack.c.l.b16 %v132
  %v168 = vunpack.c.l.b16 %v133
  %v169 = vunpack.c.l.b16 %v134
  %v170 = vunpack.c.l.b16 %v135
  %v171 = vpack.c.b16 %v156, %v155
  %v172 = vpack.c.b16 %v158, %v157
  %v173 = vpack.c.b16 %v160, %v159
  %v174 = vpack.c.b16 %v162, %v161
  %v175 = vpack.c.b16 %v164, %v163
  %v176 = vpack.c.b16 %v166, %v165
  %v177 = vpack.c.b16 %v168, %v167
  %v178 = vpack.c.b16 %v170, %v169
  %187 = vmatpush.bf16.msra.mxu0 %v178
  %188 = vmatpush.bf16.msra.mxu0 %v177
  %189 = vmatpush.bf16.msra.mxu0 %v176
  %190 = vmatpush.bf16.msra.mxu0 %v175
  %191 = vmatpush.bf16.msra.mxu0 %v174
  %192 = vmatpush.bf16.msra.mxu0 %v173
  %193 = vmatpush.bf16.msra.mxu0 %v172
  %194 = vmatpush.bf16.msra.mxu0 %v171
  %195 = vmatmul.bf16.gmra.mxu0 %v136
  %v196 = vpop.f32.mrf.mxu0
  %v197 = vadd.f32 %v137, %v196
  %v198 = vpop.f32.mrf.mxu0
  %v199 = vadd.f32 %v138, %v198
  %200 = vdwg.mxu0
  %v201 = vld [vmem:[%s3] sm:$0xff]
  %v202 = vld [vmem:[%s3 + $0x8] sm:$0xf]
  %v203 = vld [vmem:[%s3 + $0xc] sm:$0xff]
  %v204 = vld [vmem:[%s3 + $0x14] sm:$0xf]
  %v205 = vld [vmem:[%s3 + $0x18] sm:$0xff]
  %v206 = vld [vmem:[%s3 + $0x20] sm:$0xf]
  %v207 = vld [vmem:[%s3 + $0x24] sm:$0xff]
  %v208 = vld [vmem:[%s3 + $0x2c] sm:$0xf]
  %v209 = vld [vmem:[%s3 + $0x30] sm:$0xff]
  %v210 = vld [vmem:[%s3 + $0x38] sm:$0xf]
  %v211 = vld [vmem:[%s3 + $0x3c] sm:$0xff]
  %v212 = vld [vmem:[%s3 + $0x44] sm:$0xf]
  %v213 = vld [vmem:[%s3 + $0x48] sm:$0xff]
  %v214 = vld [vmem:[%s3 + $0x50] sm:$0xf]
  %v215 = vld [vmem:[%s3 + $0x54] sm:$0xff]
  %v216 = vld [vmem:[%s3 + $0x5c] sm:$0xf]
  %v217 = vld [vmem:[%s3 + $0x60] sm:$0xff]
  %v218 = vld [vmem:[%s3 + $0x68] sm:$0xf]
  %v219 = vld [vmem:[%s3 + $0x6c] sm:$0xff]
  %v220 = vld [vmem:[%s3 + $0x74] sm:$0xf]
  %v221 = vld [vmem:[%s3 + $0x78] sm:$0xff]
  %v222 = vld [vmem:[%s3 + $0x80] sm:$0xf]
  %v223 = vld [vmem:[%s3 + $0x84] sm:$0xff]
  %v224 = vld [vmem:[%s3 + $0x8c] sm:$0xf]
  %v225 = vld [vmem:[%s3 + $0x90] sm:$0xff]
  %v226 = vld [vmem:[%s3 + $0x98] sm:$0xf]
  %v227 = vld [vmem:[%s3 + $0x9c] sm:$0xff]
  %v228 = vld [vmem:[%s3 + $0xa4] sm:$0xf]
  %v229 = vld [vmem:[%s3 + $0xa8] sm:$0xff]
  %v230 = vld [vmem:[%s3 + $0xb0] sm:$0xf]
  %v231 = vld [vmem:[%s3 + $0xb4] sm:$0xff]
  %v232 = vld [vmem:[%s3 + $0xbc] sm:$0xf]
  %v233 = vpack.c.bf16 %v199, %v197
  %v234 = vld [vmem:[%s4] sm:$0x7]
  %v236 = vperm.slane %v234, 0
  %v237 = vperm.slane %v234, 1
  %v238 = vperm.slane %v234, 2
  %v274 = vunpack.c.l.b16 %v201
  %v275 = vunpack.c.h.b16 %v201
  %v276 = vunpack.c.l.b16 %v202
  %v277 = vunpack.c.l.b16 %v203
  %v278 = vunpack.c.h.b16 %v203
  %v279 = vunpack.c.l.b16 %v204
  %v280 = vunpack.c.l.b16 %v205
  %v281 = vunpack.c.h.b16 %v205
  %v282 = vunpack.c.l.b16 %v206
  %v283 = vunpack.c.l.b16 %v207
  %v284 = vunpack.c.h.b16 %v207
  %v285 = vunpack.c.l.b16 %v208
  %v286 = vunpack.c.l.b16 %v209
  %v287 = vunpack.c.h.b16 %v209
  %v288 = vunpack.c.l.b16 %v210
  %v289 = vunpack.c.l.b16 %v211
  %v290 = vunpack.c.h.b16 %v211
  %v291 = vunpack.c.l.b16 %v212
  %v292 = vunpack.c.l.b16 %v213
  %v293 = vunpack.c.h.b16 %v213
  %v294 = vunpack.c.l.b16 %v214
  %v295 = vunpack.c.l.b16 %v215
  %v296 = vunpack.c.h.b16 %v215
  %v297 = vunpack.c.l.b16 %v216
  %v298 = vunpack.c.l.b16 %v217
  %v299 = vunpack.c.h.b16 %v217
  %v300 = vunpack.c.l.b16 %v218
  %v301 = vunpack.c.l.b16 %v219
  %v302 = vunpack.c.h.b16 %v219
  %v303 = vunpack.c.l.b16 %v220
  %v304 = vunpack.c.l.b16 %v221
  %v305 = vunpack.c.h.b16 %v221
  %v306 = vunpack.c.l.b16 %v222
  %v307 = vunpack.c.l.b16 %v223
  %v308 = vunpack.c.h.b16 %v223
  %v309 = vunpack.c.l.b16 %v224
  %v310 = vunpack.c.l.b16 %v225
  %v311 = vunpack.c.h.b16 %v225
  %v312 = vunpack.c.l.b16 %v226
  %v313 = vunpack.c.l.b16 %v227
  %v314 = vunpack.c.h.b16 %v227
  %v315 = vunpack.c.l.b16 %v228
  %v316 = vunpack.c.l.b16 %v229
  %v317 = vunpack.c.h.b16 %v229
  %v318 = vunpack.c.l.b16 %v230
  %v319 = vunpack.c.l.b16 %v231
  %v320 = vunpack.c.h.b16 %v231
  %v321 = vunpack.c.l.b16 %v232
  %v322 = vpack.c.b16 %v277, %v274
  %v323 = vpack.c.b16 %v278, %v275
  %v324 = vpack.c.b16 %v279, %v276
  %v325 = vpack.c.b16 %v283, %v280
  %v326 = vpack.c.b16 %v284, %v281
  %v327 = vpack.c.b16 %v285, %v282
  %v328 = vpack.c.b16 %v289, %v286
  %v329 = vpack.c.b16 %v290, %v287
  %v330 = vpack.c.b16 %v291, %v288
  %v331 = vpack.c.b16 %v295, %v292
  %v332 = vpack.c.b16 %v296, %v293
  %v333 = vpack.c.b16 %v297, %v294
  %v334 = vpack.c.b16 %v301, %v298
  %v335 = vpack.c.b16 %v302, %v299
  %v336 = vpack.c.b16 %v303, %v300
  %v337 = vpack.c.b16 %v307, %v304
  %v338 = vpack.c.b16 %v308, %v305
  %v339 = vpack.c.b16 %v309, %v306
  %v340 = vpack.c.b16 %v313, %v310
  %v341 = vpack.c.b16 %v314, %v311
  %v342 = vpack.c.b16 %v315, %v312
  %v343 = vpack.c.b16 %v319, %v316
  %v344 = vpack.c.b16 %v320, %v317
  %v345 = vpack.c.b16 %v321, %v318
  %370 = vmatpush.bf16.msra.mxu0 %v343
  %371 = vmatpush.bf16.msra.mxu0 %v340
  %372 = vmatpush.bf16.msra.mxu0 %v337
  %373 = vmatpush.bf16.msra.mxu0 %v334
  %374 = vmatpush.bf16.msra.mxu0 %v331
  %375 = vmatpush.bf16.msra.mxu0 %v328
  %376 = vmatpush.bf16.msra.mxu0 %v325
  %377 = vmatpush.bf16.msra.mxu0 %v322
  %378 = vmatmul.bf16.gmra.mxu0 %v233
  %v379 = vpop.f32.mrf.mxu0
  %v380 = vadd.f32 %v236, %v379
  %v381 = vpop.f32.mrf.mxu0
  %v382 = vadd.f32 %v236, %v381
  %383 = vdwg.mxu0
  %384 = vmatpush.bf16.msra.mxu0 %v344
  %385 = vmatpush.bf16.msra.mxu0 %v341
  %386 = vmatpush.bf16.msra.mxu0 %v338
  %387 = vmatpush.bf16.msra.mxu0 %v335
  %388 = vmatpush.bf16.msra.mxu0 %v332
  %389 = vmatpush.bf16.msra.mxu0 %v329
  %390 = vmatpush.bf16.msra.mxu0 %v326
  %391 = vmatpush.bf16.msra.mxu0 %v323
  %392 = vmatmul.bf16.gmra.mxu0 %v233
  %v393 = vpop.f32.mrf.mxu0
  %v394 = vadd.f32 %v237, %v393
  %v395 = vpop.f32.mrf.mxu0
  %v396 = vadd.f32 %v237, %v395
  %397 = vdwg.mxu0
  %398 = vmatpush.bf16.msra.mxu0 %v345
  %399 = vmatpush.bf16.msra.mxu0 %v342
  %400 = vmatpush.bf16.msra.mxu0 %v339
  %401 = vmatpush.bf16.msra.mxu0 %v336
  %402 = vmatpush.bf16.msra.mxu0 %v333
  %403 = vmatpush.bf16.msra.mxu0 %v330
  %404 = vmatpush.bf16.msra.mxu0 %v327
  %405 = vmatpush.bf16.msra.mxu0 %v324
  %406 = vmatmul.bf16.gmra.mxu0 %v233
  %v407 = vpop.f32.mrf.mxu0
  %v408 = vadd.f32 %v238, %v407
  %v409 = vpop.f32.mrf.mxu0
  %v410 = vadd.f32 %v238, %v409
  %411 = vdwg.mxu0
  %v412 = vmul.f32 %v394, %v68
  %v413 = vmul.f32 %v396, %v69
  %v414 = vmul.f32 %v394, %v70
  %v415 = vmul.f32 %v396, %v71
  %v416 = vmul.f32 %v394, %v72
  %v417 = vmul.f32 %v396, %v73
  %v418 = vmul.f32 %v394, %v74
  %v419 = vmul.f32 %v396, %v75
  %v420 = vmul.f32 %v394, %v76
  %v421 = vmul.f32 %v396, %v77
  %v422 = vmul.f32 %v394, %v78
  %v423 = vmul.f32 %v396, %v79
  %v424 = vmul.f32 %v394, %v80
  %v425 = vmul.f32 %v396, %v81
  %v426 = vmul.f32 %v394, %v82
  %v427 = vmul.f32 %v396, %v83
  %v428 = vmul.f32 %v408, %v68
  %v429 = vmul.f32 %v410, %v69
  %v430 = vmul.f32 %v408, %v70
  %v431 = vmul.f32 %v410, %v71
  %v432 = vmul.f32 %v408, %v72
  %v433 = vmul.f32 %v410, %v73
  %v434 = vmul.f32 %v408, %v74
  %v435 = vmul.f32 %v410, %v75
  %v436 = vmul.f32 %v408, %v76
  %v437 = vmul.f32 %v410, %v77
  %v438 = vmul.f32 %v408, %v78
  %v439 = vmul.f32 %v410, %v79
  %v440 = vmul.f32 %v408, %v80
  %v441 = vmul.f32 %v410, %v81
  %v442 = vmul.f32 %v408, %v82
  %v443 = vmul.f32 %v410, %v83
  %444 = vmatpush.xpose.msra.mxu0 %v427
  %445 = vmatpush.xpose.msra.mxu0 %v426
  %446 = vmatpush.xpose.msra.mxu0 %v425
  %447 = vmatpush.xpose.msra.mxu0 %v424
  %448 = vmatpush.xpose.msra.mxu0 %v423
  %449 = vmatpush.xpose.msra.mxu0 %v422
  %450 = vmatpush.xpose.msra.mxu0 %v421
  %451 = vmatpush.xpose.msra.mxu0 %v420
  %452 = vmatpush.xpose.msra.mxu0 %v419
  %453 = vmatpush.xpose.msra.mxu0 %v418
  %454 = vmatpush.xpose.msra.mxu0 %v417
  %455 = vmatpush.xpose.msra.mxu0 %v416
  %456 = vmatpush.xpose.msra.mxu0 %v415
  %457 = vmatpush.xpose.msra.mxu0 %v414
  %458 = vmatpush.xpose.msra.mxu0 %v413
  %459 = vmatpush.xpose.msra.mxu0 %v412
  %460 = vmatmul.f32.gmra.mxu0 %v380
  %v461 = vpop.f32.mrf.mxu0
  %v462 = vadd.f32 %v84, %v461
  %463 = vmatmul.f32.gmra.mxu0 %v382
  %v464 = vpop.f32.mrf.mxu0
  %v465 = vadd.f32 %v85, %v464
  %466 = vdwg.mxu0
  %467 = vmax.xlane.f32.xlu0 %v462
  %v468 = vpop.xlane.xlu0 %467
  %469 = vmax.xlane.f32.xlu0 %v465
  %v470 = vpop.xlane.xlu0 %469
  %v471 = vsub.f32 %v462, %v468
  %v472 = vsub.f32 %v465, %v470
  %v473 = vmul.f32 %v471, 1.442695
  %v474 = vpow.pop %v473
  %v475 = vmul.f32 %v472, 1.442695
  %v476 = vpow.pop %v475
  %477 = vmatpush.msra.mxu0 %v443
  %478 = vmatpush.msra.mxu0 %v442
  %479 = vmatpush.msra.mxu0 %v441
  %480 = vmatpush.msra.mxu0 %v440
  %481 = vmatpush.msra.mxu0 %v439
  %482 = vmatpush.msra.mxu0 %v438
  %483 = vmatpush.msra.mxu0 %v437
  %484 = vmatpush.msra.mxu0 %v436
  %485 = vmatpush.msra.mxu0 %v435
  %486 = vmatpush.msra.mxu0 %v434
  %487 = vmatpush.msra.mxu0 %v433
  %488 = vmatpush.msra.mxu0 %v432
  %489 = vmatpush.msra.mxu0 %v431
  %490 = vmatpush.msra.mxu0 %v430
  %491 = vmatpush.msra.mxu0 %v429
  %492 = vmatpush.msra.mxu0 %v428
  %493 = vmatmul.f32.gmra.mxu0 %v474
  %v494 = vpop.f32.mrf.mxu0
  %v495 = vadd.f32 0.0, %v494
  %496 = vmatmul.f32.gmra.mxu0 %v476
  %v497 = vpop.f32.mrf.mxu0
  %v498 = vadd.f32 0.0, %v497
  %499 = vdwg.mxu0
  %500 = vmatpush.msra.mxu0 %v101
  %501 = vmatpush.msra.mxu0 %v100
  %502 = vmatpush.msra.mxu0 %v99
  %503 = vmatpush.msra.mxu0 %v98
  %504 = vmatpush.msra.mxu0 %v97
  %505 = vmatpush.msra.mxu0 %v96
  %506 = vmatpush.msra.mxu0 %v95
  %507 = vmatpush.msra.mxu0 %v94
  %508 = vmatpush.msra.mxu0 %v93
  %509 = vmatpush.msra.mxu0 %v92
  %510 = vmatpush.msra.mxu0 %v91
  %511 = vmatpush.msra.mxu0 %v90
  %512 = vmatpush.msra.mxu0 %v89
  %513 = vmatpush.msra.mxu0 %v88
  %514 = vmatpush.msra.mxu0 %v87
  %515 = vmatpush.msra.mxu0 %v86
  %516 = vmatmul.f32.gmra.mxu0 %v474
  %v517 = vpop.f32.mrf.mxu0
  %v518 = vadd.f32 0.0, %v517
  %519 = vmatmul.f32.gmra.mxu0 %v476
  %v520 = vpop.f32.mrf.mxu0
  %v521 = vadd.f32 0.0, %v520
  %522 = vdwg.mxu0
  %523 = vmatpush.msra.mxu0 %v117
  %524 = vmatpush.msra.mxu0 %v116
  %525 = vmatpush.msra.mxu0 %v115
  %526 = vmatpush.msra.mxu0 %v114
  %527 = vmatpush.msra.mxu0 %v113
  %528 = vmatpush.msra.mxu0 %v112
  %529 = vmatpush.msra.mxu0 %v111
  %530 = vmatpush.msra.mxu0 %v110
  %531 = vmatpush.msra.mxu0 %v109
  %532 = vmatpush.msra.mxu0 %v108
  %533 = vmatpush.msra.mxu0 %v107
  %534 = vmatpush.msra.mxu0 %v106
  %535 = vmatpush.msra.mxu0 %v105
  %536 = vmatpush.msra.mxu0 %v104
  %537 = vmatpush.msra.mxu0 %v103
  %538 = vmatpush.msra.mxu0 %v102
  %539 = vmatmul.f32.gmra.mxu0 %v518
  %v540 = vpop.f32.mrf.mxu0
  %v541 = vadd.f32 0.0, %v540
  %542 = vmatmul.f32.gmra.mxu0 %v521
  %v543 = vpop.f32.mrf.mxu0
  %v544 = vadd.f32 0.0, %v543
  %545 = vdwg.mxu0
  %v546 = vmax.f32 %v541, 1e-20
  %v547 = vmax.f32 %v544, 1e-20
  %v548 = vrcp.pop %v546
  %v549 = vrcp.pop %v547
  %v550 = vmul.f32 %v495, %v548
  %v551 = vmul.f32 %v498, %v549
  %v552 = vld [vmem:[%s5] sm:$0xf]
  %v553 = vld [vmem:[%s5 + $0x4] sm:$0xf]
  %v554 = vld [vmem:[%s5 + $0x8] sm:$0xf]
  %v555 = vld [vmem:[%s5 + $0xc] sm:$0xf]
  %v556 = vld [vmem:[%s5 + $0x10] sm:$0xf]
  %v557 = vld [vmem:[%s5 + $0x14] sm:$0xf]
  %v558 = vld [vmem:[%s5 + $0x18] sm:$0xf]
  %v559 = vld [vmem:[%s5 + $0x1c] sm:$0xf]
  %v560 = vld [vmem:[%s5 + $0x20] sm:$0xf]
  %v561 = vld [vmem:[%s5 + $0x24] sm:$0xf]
  %v562 = vld [vmem:[%s5 + $0x28] sm:$0xf]
  %v563 = vld [vmem:[%s5 + $0x2c] sm:$0xf]
  %v564 = vld [vmem:[%s5 + $0x30] sm:$0xf]
  %v565 = vld [vmem:[%s5 + $0x34] sm:$0xf]
  %v566 = vld [vmem:[%s5 + $0x38] sm:$0xf]
  %v567 = vld [vmem:[%s5 + $0x3c] sm:$0xf]
  %v568 = vpack.c.bf16 %v551, %v550
  %v569 = vld [vmem:[%s6] sm:$0x1]
  %v571 = vperm.slane %v569, 0
  %v589 = vunpack.c.l.b16 %v552
  %v590 = vunpack.c.l.b16 %v553
  %v591 = vunpack.c.l.b16 %v554
  %v592 = vunpack.c.l.b16 %v555
  %v593 = vunpack.c.l.b16 %v556
  %v594 = vunpack.c.l.b16 %v557
  %v595 = vunpack.c.l.b16 %v558
  %v596 = vunpack.c.l.b16 %v559
  %v597 = vunpack.c.l.b16 %v560
  %v598 = vunpack.c.l.b16 %v561
  %v599 = vunpack.c.l.b16 %v562
  %v600 = vunpack.c.l.b16 %v563
  %v601 = vunpack.c.l.b16 %v564
  %v602 = vunpack.c.l.b16 %v565
  %v603 = vunpack.c.l.b16 %v566
  %v604 = vunpack.c.l.b16 %v567
  %v605 = vpack.c.b16 %v590, %v589
  %v606 = vpack.c.b16 %v592, %v591
  %v607 = vpack.c.b16 %v594, %v593
  %v608 = vpack.c.b16 %v596, %v595
  %v609 = vpack.c.b16 %v598, %v597
  %v610 = vpack.c.b16 %v600, %v599
  %v611 = vpack.c.b16 %v602, %v601
  %v612 = vpack.c.b16 %v604, %v603
  %621 = vmatpush.bf16.msra.mxu0 %v612
  %622 = vmatpush.bf16.msra.mxu0 %v611
  %623 = vmatpush.bf16.msra.mxu0 %v610
  %624 = vmatpush.bf16.msra.mxu0 %v609
  %625 = vmatpush.bf16.msra.mxu0 %v608
  %626 = vmatpush.bf16.msra.mxu0 %v607
  %627 = vmatpush.bf16.msra.mxu0 %v606
  %628 = vmatpush.bf16.msra.mxu0 %v605
  %629 = vmatmul.bf16.gmra.mxu0 %v568
  %v630 = vpop.f32.mrf.mxu0
  %v631 = vadd.f32 %v571, %v630
  %v632 = vpop.f32.mrf.mxu0
  %v633 = vadd.f32 %v571, %v632
  %634 = vdwg.mxu0
  %v635 = vadd.f32 %v197, %v631
  %v636 = vadd.f32 %v199, %v633
  %v637 = vld [vmem:[%s7] sm:$0x1]
  %v638 = vld [vmem:[%s8] sm:$0x1]
  %639 = vadd.xlane.f32.xlu0 %v635
  %v640 = vpop.xlane.xlu0 %639
  %641 = vadd.xlane.f32.xlu0 %v636
  %v642 = vpop.xlane.xlu0 %641
  %v643 = vrcp.pop 128.0
  %v644 = vmul.f32 128.0, %v643
  %v645 = vsub.f32 1.0, %v644
  %v646 = vmul.f32 %v643, %v645
  %v647 = vadd.f32 %v643, %v646
  %vm648 = vweird.f32 %v643
  %v649 = vsel %vm648, %v643, %v647
  %v650 = vmul.f32 %v640, %v649
  %v651 = vmul.f32 %v642, %v649
  %v652 = vsub.f32 %v635, %v650
  %v653 = vsub.f32 %v636, %v651
  %v654 = vmul.f32 %v652, %v652
  %v655 = vmul.f32 %v653, %v653
  %656 = vadd.xlane.f32.xlu0 %v654
  %v657 = vpop.xlane.xlu0 %656
  %658 = vadd.xlane.f32.xlu0 %v655
  %v659 = vpop.xlane.xlu0 %658
  %v660 = vmul.f32 %v657, %v649
  %v661 = vmul.f32 %v659, %v649
  %v662 = vadd.f32 %v660, 1e-05
  %v663 = vadd.f32 %v661, 1e-05
  %v664 = vrsqrt.pop %v662
  %v665 = vmul.f32 %v664, %v662
  %v666 = vmul.f32 %v665, %v664
  %v667 = vmul.f32 0.5, %v666
  %v668 = vsub.f32 1.5, %v667
  %v669 = vmul.f32 %v664, %v668
  %vm670 = vweird.f32 %v662
  %vm671 = vweird.f32 %v664
  %vm672 = vmor %vm670, %vm671
  %v673 = vsel %vm672, %v664, %v669
  %v674 = vrsqrt.pop %v663
  %v675 = vmul.f32 %v674, %v663
  %v676 = vmul.f32 %v675, %v674
  %v677 = vmul.f32 0.5, %v676
  %v678 = vsub.f32 1.5, %v677
  %v679 = vmul.f32 %v674, %v678
  %vm680 = vweird.f32 %v663
  %vm681 = vweird.f32 %v674
  %vm682 = vmor %vm680, %vm681
  %v683 = vsel %vm682, %v674, %v679
  %v684 = vmul.f32 %v652, %v673
  %v685 = vmul.f32 %v653, %v683
  %v687 = vperm.slane %v637, 0
  %v689 = vmul.f32 %v684, %v687
  %v690 = vmul.f32 %v685, %v687
  %v692 = vperm.slane %v638, 0
  %v694 = vadd.f32 %v689, %v692
  %v695 = vadd.f32 %v690, %v692
  %v696 = vld [vmem:[%s9] sm:$0xff]
  %v697 = vld [vmem:[%s9 + $0x8] sm:$0xff]
  %v698 = vld [vmem:[%s9 + $0x10] sm:$0xff]
  %v699 = vld [vmem:[%s9 + $0x18] sm:$0xff]
  %v700 = vld [vmem:[%s9 + $0x20] sm:$0xff]
  %v701 = vld [vmem:[%s9 + $0x28] sm:$0xff]
  %v702 = vld [vmem:[%s9 + $0x30] sm:$0xff]
  %v703 = vld [vmem:[%s9 + $0x38] sm:$0xff]
  %v704 = vld [vmem:[%s9 + $0x40] sm:$0xff]
  %v705 = vld [vmem:[%s9 + $0x48] sm:$0xff]
  %v706 = vld [vmem:[%s9 + $0x50] sm:$0xff]
  %v707 = vld [vmem:[%s9 + $0x58] sm:$0xff]
  %v708 = vld [vmem:[%s9 + $0x60] sm:$0xff]
  %v709 = vld [vmem:[%s9 + $0x68] sm:$0xff]
  %v710 = vld [vmem:[%s9 + $0x70] sm:$0xff]
  %v711 = vld [vmem:[%s9 + $0x78] sm:$0xff]
  %v712 = vpack.c.bf16 %v695, %v694
  %v713 = vld [vmem:[%s10] sm:$0x3]
  %v715 = vperm.slane %v713, 0
  %v716 = vperm.slane %v713, 1
  %v735 = vunpack.c.l.b16 %v696
  %v736 = vunpack.c.h.b16 %v696
  %v737 = vunpack.c.l.b16 %v697
  %v738 = vunpack.c.h.b16 %v697
  %v739 = vunpack.c.l.b16 %v698
  %v740 = vunpack.c.h.b16 %v698
  %v741 = vunpack.c.l.b16 %v699
  %v742 = vunpack.c.h.b16 %v699
  %v743 = vunpack.c.l.b16 %v700
  %v744 = vunpack.c.h.b16 %v700
  %v745 = vunpack.c.l.b16 %v701
  %v746 = vunpack.c.h.b16 %v701
  %v747 = vunpack.c.l.b16 %v702
  %v748 = vunpack.c.h.b16 %v702
  %v749 = vunpack.c.l.b16 %v703
  %v750 = vunpack.c.h.b16 %v703
  %v751 = vunpack.c.l.b16 %v704
  %v752 = vunpack.c.h.b16 %v704
  %v753 = vunpack.c.l.b16 %v705
  %v754 = vunpack.c.h.b16 %v705
  %v755 = vunpack.c.l.b16 %v706
  %v756 = vunpack.c.h.b16 %v706
  %v757 = vunpack.c.l.b16 %v707
  %v758 = vunpack.c.h.b16 %v707
  %v759 = vunpack.c.l.b16 %v708
  %v760 = vunpack.c.h.b16 %v708
  %v761 = vunpack.c.l.b16 %v709
  %v762 = vunpack.c.h.b16 %v709
  %v763 = vunpack.c.l.b16 %v710
  %v764 = vunpack.c.h.b16 %v710
  %v765 = vunpack.c.l.b16 %v711
  %v766 = vunpack.c.h.b16 %v711
  %v767 = vpack.c.b16 %v737, %v735
  %v768 = vpack.c.b16 %v738, %v736
  %v769 = vpack.c.b16 %v741, %v739
  %v770 = vpack.c.b16 %v742, %v740
  %v771 = vpack.c.b16 %v745, %v743
  %v772 = vpack.c.b16 %v746, %v744
  %v773 = vpack.c.b16 %v749, %v747
  %v774 = vpack.c.b16 %v750, %v748
  %v775 = vpack.c.b16 %v753, %v751
  %v776 = vpack.c.b16 %v754, %v752
  %v777 = vpack.c.b16 %v757, %v755
  %v778 = vpack.c.b16 %v758, %v756
  %v779 = vpack.c.b16 %v761, %v759
  %v780 = vpack.c.b16 %v762, %v760
  %v781 = vpack.c.b16 %v765, %v763
  %v782 = vpack.c.b16 %v766, %v764
  %799 = vmatpush.bf16.msra.mxu0 %v781
  %800 = vmatpush.bf16.msra.mxu0 %v779
  %801 = vmatpush.bf16.msra.mxu0 %v777
  %802 = vmatpush.bf16.msra.mxu0 %v775
  %803 = vmatpush.bf16.msra.mxu0 %v773
  %804 = vmatpush.bf16.msra.mxu0 %v771
  %805 = vmatpush.bf16.msra.mxu0 %v769
  %806 = vmatpush.bf16.msra.mxu0 %v767
  %807 = vmatmul.bf16.gmra.mxu0 %v712
  %v808 = vpop.f32.mrf.mxu0
  %v809 = vadd.f32 %v715, %v808
  %v810 = vpop.f32.mrf.mxu0
  %v811 = vadd.f32 %v715, %v810
  %812 = vdwg.mxu0
  %813 = vmatpush.bf16.msra.mxu0 %v782
  %814 = vmatpush.bf16.msra.mxu0 %v780
  %815 = vmatpush.bf16.msra.mxu0 %v778
  %816 = vmatpush.bf16.msra.mxu0 %v776
  %817 = vmatpush.bf16.msra.mxu0 %v774
  %818 = vmatpush.bf16.msra.mxu0 %v772
  %819 = vmatpush.bf16.msra.mxu0 %v770
  %820 = vmatpush.bf16.msra.mxu0 %v768
  %821 = vmatmul.bf16.gmra.mxu0 %v712
  %v822 = vpop.f32.mrf.mxu0
  %v823 = vadd.f32 %v716, %v822
  %v824 = vpop.f32.mrf.mxu0
  %v825 = vadd.f32 %v716, %v824
  %826 = vdwg.mxu0
  %v827 = vmax.f32 %v809, 0.0
  %v828 = vmax.f32 %v823, 0.0
  %v829 = vmax.f32 %v811, 0.0
  %v830 = vmax.f32 %v825, 0.0
  %v831 = vld [vmem:[%s11] sm:$0xf]
  %v832 = vld [vmem:[%s11 + $0x4] sm:$0xf]
  %v833 = vld [vmem:[%s11 + $0x8] sm:$0xf]
  %v834 = vld [vmem:[%s11 + $0xc] sm:$0xf]
  %v835 = vld [vmem:[%s11 + $0x10] sm:$0xf]
  %v836 = vld [vmem:[%s11 + $0x14] sm:$0xf]
  %v837 = vld [vmem:[%s11 + $0x18] sm:$0xf]
  %v838 = vld [vmem:[%s11 + $0x1c] sm:$0xf]
  %v839 = vld [vmem:[%s11 + $0x20] sm:$0xf]
  %v840 = vld [vmem:[%s11 + $0x24] sm:$0xf]
  %v841 = vld [vmem:[%s11 + $0x28] sm:$0xf]
  %v842 = vld [vmem:[%s11 + $0x2c] sm:$0xf]
  %v843 = vld [vmem:[%s11 + $0x30] sm:$0xf]
  %v844 = vld [vmem:[%s11 + $0x34] sm:$0xf]
  %v845 = vld [vmem:[%s11 + $0x38] sm:$0xf]
  %v846 = vld [vmem:[%s11 + $0x3c] sm:$0xf]
  %v847 = vld [vmem:[%s11 + $0x40] sm:$0xf]
  %v848 = vld [vmem:[%s11 + $0x44] sm:$0xf]
  %v849 = vld [vmem:[%s11 + $0x48] sm:$0xf]
  %v850 = vld [vmem:[%s11 + $0x4c] sm:$0xf]
  %v851 = vld [vmem:[%s11 + $0x50] sm:$0xf]
  %v852 = vld [vmem:[%s11 + $0x54] sm:$0xf]
  %v853 = vld [vmem:[%s11 + $0x58] sm:$0xf]
  %v854 = vld [vmem:[%s11 + $0x5c] sm:$0xf]
  %v855 = vld [vmem:[%s11 + $0x60] sm:$0xf]
  %v856 = vld [vmem:[%s11 + $0x64] sm:$0xf]
  %v857 = vld [vmem:[%s11 + $0x68] sm:$0xf]
  %v858 = vld [vmem:[%s11 + $0x6c] sm:$0xf]
  %v859 = vld [vmem:[%s11 + $0x70] sm:$0xf]
  %v860 = vld [vmem:[%s11 + $0x74] sm:$0xf]
  %v861 = vld [vmem:[%s11 + $0x78] sm:$0xf]
  %v862 = vld [vmem:[%s11 + $0x7c] sm:$0xf]
  %v863 = vpack.c.bf16 %v829, %v827
  %v864 = vpack.c.bf16 %v830, %v828
  %v865 = vld [vmem:[%s12] sm:$0x1]
  %v867 = vperm.slane %v865, 0
  %v901 = vunpack.c.l.b16 %v831
  %v902 = vunpack.c.l.b16 %v832
  %v903 = vunpack.c.l.b16 %v833
  %v904 = vunpack.c.l.b16 %v834
  %v905 = vunpack.c.l.b16 %v835
  %v906 = vunpack.c.l.b16 %v836
  %v907 = vunpack.c.l.b16 %v837
  %v908 = vunpack.c.l.b16 %v838
  %v909 = vunpack.c.l.b16 %v839
  %v910 = vunpack.c.l.b16 %v840
  %v911 = vunpack.c.l.b16 %v841
  %v912 = vunpack.c.l.b16 %v842
  %v913 = vunpack.c.l.b16 %v843
  %v914 = vunpack.c.l.b16 %v844
  %v915 = vunpack.c.l.b16 %v845
  %v916 = vunpack.c.l.b16 %v846
  %v917 = vunpack.c.l.b16 %v847
  %v918 = vunpack.c.l.b16 %v848
  %v919 = vunpack.c.l.b16 %v849
  %v920 = vunpack.c.l.b16 %v850
  %v921 = vunpack.c.l.b16 %v851
  %v922 = vunpack.c.l.b16 %v852
  %v923 = vunpack.c.l.b16 %v853
  %v924 = vunpack.c.l.b16 %v854
  %v925 = vunpack.c.l.b16 %v855
  %v926 = vunpack.c.l.b16 %v856
  %v927 = vunpack.c.l.b16 %v857
  %v928 = vunpack.c.l.b16 %v858
  %v929 = vunpack.c.l.b16 %v859
  %v930 = vunpack.c.l.b16 %v860
  %v931 = vunpack.c.l.b16 %v861
  %v932 = vunpack.c.l.b16 %v862
  %v933 = vpack.c.b16 %v902, %v901
  %v934 = vpack.c.b16 %v904, %v903
  %v935 = vpack.c.b16 %v906, %v905
  %v936 = vpack.c.b16 %v908, %v907
  %v937 = vpack.c.b16 %v910, %v909
  %v938 = vpack.c.b16 %v912, %v911
  %v939 = vpack.c.b16 %v914, %v913
  %v940 = vpack.c.b16 %v916, %v915
  %v941 = vpack.c.b16 %v918, %v917
  %v942 = vpack.c.b16 %v920, %v919
  %v943 = vpack.c.b16 %v922, %v921
  %v944 = vpack.c.b16 %v924, %v923
  %v945 = vpack.c.b16 %v926, %v925
  %v946 = vpack.c.b16 %v928, %v927
  %v947 = vpack.c.b16 %v930, %v929
  %v948 = vpack.c.b16 %v932, %v931
  %965 = vmatpush.bf16.msra.mxu0 %v940
  %966 = vmatpush.bf16.msra.mxu0 %v939
  %967 = vmatpush.bf16.msra.mxu0 %v938
  %968 = vmatpush.bf16.msra.mxu0 %v937
  %969 = vmatpush.bf16.msra.mxu0 %v936
  %970 = vmatpush.bf16.msra.mxu0 %v935
  %971 = vmatpush.bf16.msra.mxu0 %v934
  %972 = vmatpush.bf16.msra.mxu0 %v933
  %973 = vmatmul.bf16.gmra.mxu0 %v863
  %v974 = vpop.f32.mrf.mxu0
  %v975 = vadd.f32 %v867, %v974
  %v976 = vpop.f32.mrf.mxu0
  %v977 = vadd.f32 %v867, %v976
  %978 = vdwg.mxu0
  %979 = vmatpush.bf16.msra.mxu0 %v948
  %980 = vmatpush.bf16.msra.mxu0 %v947
  %981 = vmatpush.bf16.msra.mxu0 %v946
  %982 = vmatpush.bf16.msra.mxu0 %v945
  %983 = vmatpush.bf16.msra.mxu0 %v944
  %984 = vmatpush.bf16.msra.mxu0 %v943
  %985 = vmatpush.bf16.msra.mxu0 %v942
  %986 = vmatpush.bf16.msra.mxu0 %v941
  %987 = vmatmul.bf16.gmra.mxu0 %v864
  %v988 = vpop.f32.mrf.mxu0
  %v989 = vadd.f32 %v975, %v988
  %v990 = vpop.f32.mrf.mxu0
  %v991 = vadd.f32 %v977, %v990
  %992 = vdwg.mxu0
  %v993 = vadd.f32 %v694, %v989
  %v994 = vadd.f32 %v695, %v991
  %v995 = vld [vmem:[%s13] sm:$0x1]
  %v996 = vld [vmem:[%s14] sm:$0x1]
  %997 = vadd.xlane.f32.xlu0 %v993
  %v998 = vpop.xlane.xlu0 %997
  %999 = vadd.xlane.f32.xlu0 %v994
  %v1000 = vpop.xlane.xlu0 %999
  %v1001 = vmul.f32 %v998, %v649
  %v1002 = vmul.f32 %v1000, %v649
  %v1003 = vsub.f32 %v993, %v1001
  %v1004 = vsub.f32 %v994, %v1002
  %v1005 = vmul.f32 %v1003, %v1003
  %v1006 = vmul.f32 %v1004, %v1004
  %1007 = vadd.xlane.f32.xlu0 %v1005
  %v1008 = vpop.xlane.xlu0 %1007
  %1009 = vadd.xlane.f32.xlu0 %v1006
  %v1010 = vpop.xlane.xlu0 %1009
  %v1011 = vmul.f32 %v1008, %v649
  %v1012 = vmul.f32 %v1010, %v649
  %v1013 = vadd.f32 %v1011, 1e-05
  %v1014 = vadd.f32 %v1012, 1e-05
  %v1015 = vrsqrt.pop %v1013
  %v1016 = vmul.f32 %v1015, %v1013
  %v1017 = vmul.f32 %v1016, %v1015
  %v1018 = vmul.f32 0.5, %v1017
  %v1019 = vsub.f32 1.5, %v1018
  %v1020 = vmul.f32 %v1015, %v1019
  %vm1021 = vweird.f32 %v1013
  %vm1022 = vweird.f32 %v1015
  %vm1023 = vmor %vm1021, %vm1022
  %v1024 = vsel %vm1023, %v1015, %v1020
  %v1025 = vrsqrt.pop %v1014
  %v1026 = vmul.f32 %v1025, %v1014
  %v1027 = vmul.f32 %v1026, %v1025
  %v1028 = vmul.f32 0.5, %v1027
  %v1029 = vsub.f32 1.5, %v1028
  %v1030 = vmul.f32 %v1025, %v1029
  %vm1031 = vweird.f32 %v1014
  %vm1032 = vweird.f32 %v1025
  %vm1033 = vmor %vm1031, %vm1032
  %v1034 = vsel %vm1033, %v1025, %v1030
  %v1035 = vmul.f32 %v1003, %v1024
  %v1036 = vmul.f32 %v1004, %v1034
  %v1038 = vperm.slane %v995, 0
  %v1040 = vmul.f32 %v1035, %v1038
  %v1041 = vmul.f32 %v1036, %v1038
  %v1043 = vperm.slane %v996, 0
  %v1045 = vadd.f32 %v1040, %v1043
  %v1046 = vadd.f32 %v1041, %v1043
  %s1047 = scalar_lea.vmem %s3, 192
  %v1048 = vld [vmem:[%s1047] sm:$0xff]
  %v1049 = vld [vmem:[%s1047 + $0x8] sm:$0xf]
  %v1050 = vld [vmem:[%s1047 + $0xc] sm:$0xff]
  %v1051 = vld [vmem:[%s1047 + $0x14] sm:$0xf]
  %v1052 = vld [vmem:[%s1047 + $0x18] sm:$0xff]
  %v1053 = vld [vmem:[%s1047 + $0x20] sm:$0xf]
  %v1054 = vld [vmem:[%s1047 + $0x24] sm:$0xff]
  %v1055 = vld [vmem:[%s1047 + $0x2c] sm:$0xf]
  %v1056 = vld [vmem:[%s1047 + $0x30] sm:$0xff]
  %v1057 = vld [vmem:[%s1047 + $0x38] sm:$0xf]
  %v1058 = vld [vmem:[%s1047 + $0x3c] sm:$0xff]
  %v1059 = vld [vmem:[%s1047 + $0x44] sm:$0xf]
  %v1060 = vld [vmem:[%s1047 + $0x48] sm:$0xff]
  %v1061 = vld [vmem:[%s1047 + $0x50] sm:$0xf]
  %v1062 = vld [vmem:[%s1047 + $0x54] sm:$0xff]
  %v1063 = vld [vmem:[%s1047 + $0x5c] sm:$0xf]
  %v1064 = vld [vmem:[%s1047 + $0x60] sm:$0xff]
  %v1065 = vld [vmem:[%s1047 + $0x68] sm:$0xf]
  %v1066 = vld [vmem:[%s1047 + $0x6c] sm:$0xff]
  %v1067 = vld [vmem:[%s1047 + $0x74] sm:$0xf]
  %v1068 = vld [vmem:[%s1047 + $0x78] sm:$0xff]
  %v1069 = vld [vmem:[%s1047 + $0x80] sm:$0xf]
  %v1070 = vld [vmem:[%s1047 + $0x84] sm:$0xff]
  %v1071 = vld [vmem:[%s1047 + $0x8c] sm:$0xf]
  %v1072 = vld [vmem:[%s1047 + $0x90] sm:$0xff]
  %v1073 = vld [vmem:[%s1047 + $0x98] sm:$0xf]
  %v1074 = vld [vmem:[%s1047 + $0x9c] sm:$0xff]
  %v1075 = vld [vmem:[%s1047 + $0xa4] sm:$0xf]
  %v1076 = vld [vmem:[%s1047 + $0xa8] sm:$0xff]
  %v1077 = vld [vmem:[%s1047 + $0xb0] sm:$0xf]
  %v1078 = vld [vmem:[%s1047 + $0xb4] sm:$0xff]
  %v1079 = vld [vmem:[%s1047 + $0xbc] sm:$0xf]
  %v1080 = vpack.c.bf16 %v1046, %v1045
  %s1081 = scalar_lea.vmem %s4, 3
  %v1082 = vld [vmem:[%s1081] sm:$0x7]
  %v1084 = vperm.slane %v1082, 0
  %v1085 = vperm.slane %v1082, 1
  %v1086 = vperm.slane %v1082, 2
  %v1122 = vunpack.c.l.b16 %v1048
  %v1123 = vunpack.c.h.b16 %v1048
  %v1124 = vunpack.c.l.b16 %v1049
  %v1125 = vunpack.c.l.b16 %v1050
  %v1126 = vunpack.c.h.b16 %v1050
  %v1127 = vunpack.c.l.b16 %v1051
  %v1128 = vunpack.c.l.b16 %v1052
  %v1129 = vunpack.c.h.b16 %v1052
  %v1130 = vunpack.c.l.b16 %v1053
  %v1131 = vunpack.c.l.b16 %v1054
  %v1132 = vunpack.c.h.b16 %v1054
  %v1133 = vunpack.c.l.b16 %v1055
  %v1134 = vunpack.c.l.b16 %v1056
  %v1135 = vunpack.c.h.b16 %v1056
  %v1136 = vunpack.c.l.b16 %v1057
  %v1137 = vunpack.c.l.b16 %v1058
  %v1138 = vunpack.c.h.b16 %v1058
  %v1139 = vunpack.c.l.b16 %v1059
  %v1140 = vunpack.c.l.b16 %v1060
  %v1141 = vunpack.c.h.b16 %v1060
  %v1142 = vunpack.c.l.b16 %v1061
  %v1143 = vunpack.c.l.b16 %v1062
  %v1144 = vunpack.c.h.b16 %v1062
  %v1145 = vunpack.c.l.b16 %v1063
  %v1146 = vunpack.c.l.b16 %v1064
  %v1147 = vunpack.c.h.b16 %v1064
  %v1148 = vunpack.c.l.b16 %v1065
  %v1149 = vunpack.c.l.b16 %v1066
  %v1150 = vunpack.c.h.b16 %v1066
  %v1151 = vunpack.c.l.b16 %v1067
  %v1152 = vunpack.c.l.b16 %v1068
  %v1153 = vunpack.c.h.b16 %v1068
  %v1154 = vunpack.c.l.b16 %v1069
  %v1155 = vunpack.c.l.b16 %v1070
  %v1156 = vunpack.c.h.b16 %v1070
  %v1157 = vunpack.c.l.b16 %v1071
  %v1158 = vunpack.c.l.b16 %v1072
  %v1159 = vunpack.c.h.b16 %v1072
  %v1160 = vunpack.c.l.b16 %v1073
  %v1161 = vunpack.c.l.b16 %v1074
  %v1162 = vunpack.c.h.b16 %v1074
  %v1163 = vunpack.c.l.b16 %v1075
  %v1164 = vunpack.c.l.b16 %v1076
  %v1165 = vunpack.c.h.b16 %v1076
  %v1166 = vunpack.c.l.b16 %v1077
  %v1167 = vunpack.c.l.b16 %v1078
  %v1168 = vunpack.c.h.b16 %v1078
  %v1169 = vunpack.c.l.b16 %v1079
  %v1170 = vpack.c.b16 %v1125, %v1122
  %v1171 = vpack.c.b16 %v1126, %v1123
  %v1172 = vpack.c.b16 %v1127, %v1124
  %v1173 = vpack.c.b16 %v1131, %v1128
  %v1174 = vpack.c.b16 %v1132, %v1129
  %v1175 = vpack.c.b16 %v1133, %v1130
  %v1176 = vpack.c.b16 %v1137, %v1134
  %v1177 = vpack.c.b16 %v1138, %v1135
  %v1178 = vpack.c.b16 %v1139, %v1136
  %v1179 = vpack.c.b16 %v1143, %v1140
  %v1180 = vpack.c.b16 %v1144, %v1141
  %v1181 = vpack.c.b16 %v1145, %v1142
  %v1182 = vpack.c.b16 %v1149, %v1146
  %v1183 = vpack.c.b16 %v1150, %v1147
  %v1184 = vpack.c.b16 %v1151, %v1148
  %v1185 = vpack.c.b16 %v1155, %v1152
  %v1186 = vpack.c.b16 %v1156, %v1153
  %v1187 = vpack.c.b16 %v1157, %v1154
  %v1188 = vpack.c.b16 %v1161, %v1158
  %v1189 = vpack.c.b16 %v1162, %v1159
  %v1190 = vpack.c.b16 %v1163, %v1160
  %v1191 = vpack.c.b16 %v1167, %v1164
  %v1192 = vpack.c.b16 %v1168, %v1165
  %v1193 = vpack.c.b16 %v1169, %v1166
  %1218 = vmatpush.bf16.msra.mxu0 %v1191
  %1219 = vmatpush.bf16.msra.mxu0 %v1188
  %1220 = vmatpush.bf16.msra.mxu0 %v1185
  %1221 = vmatpush.bf16.msra.mxu0 %v1182
  %1222 = vmatpush.bf16.msra.mxu0 %v1179
  %1223 = vmatpush.bf16.msra.mxu0 %v1176
  %1224 = vmatpush.bf16.msra.mxu0 %v1173
  %1225 = vmatpush.bf16.msra.mxu0 %v1170
  %1226 = vmatmul.bf16.gmra.mxu0 %v1080
  %v1227 = vpop.f32.mrf.mxu0
  %v1228 = vadd.f32 %v1084, %v1227
  %v1229 = vpop.f32.mrf.mxu0
  %v1230 = vadd.f32 %v1084, %v1229
  %1231 = vdwg.mxu0
  %1232 = vmatpush.bf16.msra.mxu0 %v1192
  %1233 = vmatpush.bf16.msra.mxu0 %v1189
  %1234 = vmatpush.bf16.msra.mxu0 %v1186
  %1235 = vmatpush.bf16.msra.mxu0 %v1183
  %1236 = vmatpush.bf16.msra.mxu0 %v1180
  %1237 = vmatpush.bf16.msra.mxu0 %v1177
  %1238 = vmatpush.bf16.msra.mxu0 %v1174
  %1239 = vmatpush.bf16.msra.mxu0 %v1171
  %1240 = vmatmul.bf16.gmra.mxu0 %v1080
  %v1241 = vpop.f32.mrf.mxu0
  %v1242 = vadd.f32 %v1085, %v1241
  %v1243 = vpop.f32.mrf.mxu0
  %v1244 = vadd.f32 %v1085, %v1243
  %1245 = vdwg.mxu0
  %1246 = vmatpush.bf16.msra.mxu0 %v1193
  %1247 = vmatpush.bf16.msra.mxu0 %v1190
  %1248 = vmatpush.bf16.msra.mxu0 %v1187
  %1249 = vmatpush.bf16.msra.mxu0 %v1184
  %1250 = vmatpush.bf16.msra.mxu0 %v1181
  %1251 = vmatpush.bf16.msra.mxu0 %v1178
  %1252 = vmatpush.bf16.msra.mxu0 %v1175
  %1253 = vmatpush.bf16.msra.mxu0 %v1172
  %1254 = vmatmul.bf16.gmra.mxu0 %v1080
  %v1255 = vpop.f32.mrf.mxu0
  %v1256 = vadd.f32 %v1086, %v1255
  %v1257 = vpop.f32.mrf.mxu0
  %v1258 = vadd.f32 %v1086, %v1257
  %1259 = vdwg.mxu0
  %v1260 = vmul.f32 %v1242, %v68
  %v1261 = vmul.f32 %v1244, %v69
  %v1262 = vmul.f32 %v1242, %v70
  %v1263 = vmul.f32 %v1244, %v71
  %v1264 = vmul.f32 %v1242, %v72
  %v1265 = vmul.f32 %v1244, %v73
  %v1266 = vmul.f32 %v1242, %v74
  %v1267 = vmul.f32 %v1244, %v75
  %v1268 = vmul.f32 %v1242, %v76
  %v1269 = vmul.f32 %v1244, %v77
  %v1270 = vmul.f32 %v1242, %v78
  %v1271 = vmul.f32 %v1244, %v79
  %v1272 = vmul.f32 %v1242, %v80
  %v1273 = vmul.f32 %v1244, %v81
  %v1274 = vmul.f32 %v1242, %v82
  %v1275 = vmul.f32 %v1244, %v83
  %v1276 = vmul.f32 %v1256, %v68
  %v1277 = vmul.f32 %v1258, %v69
  %v1278 = vmul.f32 %v1256, %v70
  %v1279 = vmul.f32 %v1258, %v71
  %v1280 = vmul.f32 %v1256, %v72
  %v1281 = vmul.f32 %v1258, %v73
  %v1282 = vmul.f32 %v1256, %v74
  %v1283 = vmul.f32 %v1258, %v75
  %v1284 = vmul.f32 %v1256, %v76
  %v1285 = vmul.f32 %v1258, %v77
  %v1286 = vmul.f32 %v1256, %v78
  %v1287 = vmul.f32 %v1258, %v79
  %v1288 = vmul.f32 %v1256, %v80
  %v1289 = vmul.f32 %v1258, %v81
  %v1290 = vmul.f32 %v1256, %v82
  %v1291 = vmul.f32 %v1258, %v83
  %1292 = vmatpush.xpose.msra.mxu0 %v1275
  %1293 = vmatpush.xpose.msra.mxu0 %v1274
  %1294 = vmatpush.xpose.msra.mxu0 %v1273
  %1295 = vmatpush.xpose.msra.mxu0 %v1272
  %1296 = vmatpush.xpose.msra.mxu0 %v1271
  %1297 = vmatpush.xpose.msra.mxu0 %v1270
  %1298 = vmatpush.xpose.msra.mxu0 %v1269
  %1299 = vmatpush.xpose.msra.mxu0 %v1268
  %1300 = vmatpush.xpose.msra.mxu0 %v1267
  %1301 = vmatpush.xpose.msra.mxu0 %v1266
  %1302 = vmatpush.xpose.msra.mxu0 %v1265
  %1303 = vmatpush.xpose.msra.mxu0 %v1264
  %1304 = vmatpush.xpose.msra.mxu0 %v1263
  %1305 = vmatpush.xpose.msra.mxu0 %v1262
  %1306 = vmatpush.xpose.msra.mxu0 %v1261
  %1307 = vmatpush.xpose.msra.mxu0 %v1260
  %1308 = vmatmul.f32.gmra.mxu0 %v1228
  %v1309 = vpop.f32.mrf.mxu0
  %v1310 = vadd.f32 %v84, %v1309
  %1311 = vmatmul.f32.gmra.mxu0 %v1230
  %v1312 = vpop.f32.mrf.mxu0
  %v1313 = vadd.f32 %v85, %v1312
  %1314 = vdwg.mxu0
  %1315 = vmax.xlane.f32.xlu0 %v1310
  %v1316 = vpop.xlane.xlu0 %1315
  %1317 = vmax.xlane.f32.xlu0 %v1313
  %v1318 = vpop.xlane.xlu0 %1317
  %v1319 = vsub.f32 %v1310, %v1316
  %v1320 = vsub.f32 %v1313, %v1318
  %v1321 = vmul.f32 %v1319, 1.442695
  %v1322 = vpow.pop %v1321
  %v1323 = vmul.f32 %v1320, 1.442695
  %v1324 = vpow.pop %v1323
  %1325 = vmatpush.msra.mxu0 %v1291
  %1326 = vmatpush.msra.mxu0 %v1290
  %1327 = vmatpush.msra.mxu0 %v1289
  %1328 = vmatpush.msra.mxu0 %v1288
  %1329 = vmatpush.msra.mxu0 %v1287
  %1330 = vmatpush.msra.mxu0 %v1286
  %1331 = vmatpush.msra.mxu0 %v1285
  %1332 = vmatpush.msra.mxu0 %v1284
  %1333 = vmatpush.msra.mxu0 %v1283
  %1334 = vmatpush.msra.mxu0 %v1282
  %1335 = vmatpush.msra.mxu0 %v1281
  %1336 = vmatpush.msra.mxu0 %v1280
  %1337 = vmatpush.msra.mxu0 %v1279
  %1338 = vmatpush.msra.mxu0 %v1278
  %1339 = vmatpush.msra.mxu0 %v1277
  %1340 = vmatpush.msra.mxu0 %v1276
  %1341 = vmatmul.f32.gmra.mxu0 %v1322
  %v1342 = vpop.f32.mrf.mxu0
  %v1343 = vadd.f32 0.0, %v1342
  %1344 = vmatmul.f32.gmra.mxu0 %v1324
  %v1345 = vpop.f32.mrf.mxu0
  %v1346 = vadd.f32 0.0, %v1345
  %1347 = vdwg.mxu0
  %1348 = vmatpush.msra.mxu0 %v101
  %1349 = vmatpush.msra.mxu0 %v100
  %1350 = vmatpush.msra.mxu0 %v99
  %1351 = vmatpush.msra.mxu0 %v98
  %1352 = vmatpush.msra.mxu0 %v97
  %1353 = vmatpush.msra.mxu0 %v96
  %1354 = vmatpush.msra.mxu0 %v95
  %1355 = vmatpush.msra.mxu0 %v94
  %1356 = vmatpush.msra.mxu0 %v93
  %1357 = vmatpush.msra.mxu0 %v92
  %1358 = vmatpush.msra.mxu0 %v91
  %1359 = vmatpush.msra.mxu0 %v90
  %1360 = vmatpush.msra.mxu0 %v89
  %1361 = vmatpush.msra.mxu0 %v88
  %1362 = vmatpush.msra.mxu0 %v87
  %1363 = vmatpush.msra.mxu0 %v86
  %1364 = vmatmul.f32.gmra.mxu0 %v1322
  %v1365 = vpop.f32.mrf.mxu0
  %v1366 = vadd.f32 0.0, %v1365
  %1367 = vmatmul.f32.gmra.mxu0 %v1324
  %v1368 = vpop.f32.mrf.mxu0
  %v1369 = vadd.f32 0.0, %v1368
  %1370 = vdwg.mxu0
  %1371 = vmatpush.msra.mxu0 %v117
  %1372 = vmatpush.msra.mxu0 %v116
  %1373 = vmatpush.msra.mxu0 %v115
  %1374 = vmatpush.msra.mxu0 %v114
  %1375 = vmatpush.msra.mxu0 %v113
  %1376 = vmatpush.msra.mxu0 %v112
  %1377 = vmatpush.msra.mxu0 %v111
  %1378 = vmatpush.msra.mxu0 %v110
  %1379 = vmatpush.msra.mxu0 %v109
  %1380 = vmatpush.msra.mxu0 %v108
  %1381 = vmatpush.msra.mxu0 %v107
  %1382 = vmatpush.msra.mxu0 %v106
  %1383 = vmatpush.msra.mxu0 %v105
  %1384 = vmatpush.msra.mxu0 %v104
  %1385 = vmatpush.msra.mxu0 %v103
  %1386 = vmatpush.msra.mxu0 %v102
  %1387 = vmatmul.f32.gmra.mxu0 %v1366
  %v1388 = vpop.f32.mrf.mxu0
  %v1389 = vadd.f32 0.0, %v1388
  %1390 = vmatmul.f32.gmra.mxu0 %v1369
  %v1391 = vpop.f32.mrf.mxu0
  %v1392 = vadd.f32 0.0, %v1391
  %1393 = vdwg.mxu0
  %v1394 = vmax.f32 %v1389, 1e-20
  %v1395 = vmax.f32 %v1392, 1e-20
  %v1396 = vrcp.pop %v1394
  %v1397 = vrcp.pop %v1395
  %v1398 = vmul.f32 %v1343, %v1396
  %v1399 = vmul.f32 %v1346, %v1397
  %s1400 = scalar_lea.vmem %s5, 64
  %v1401 = vld [vmem:[%s1400] sm:$0xf]
  %v1402 = vld [vmem:[%s1400 + $0x4] sm:$0xf]
  %v1403 = vld [vmem:[%s1400 + $0x8] sm:$0xf]
  %v1404 = vld [vmem:[%s1400 + $0xc] sm:$0xf]
  %v1405 = vld [vmem:[%s1400 + $0x10] sm:$0xf]
  %v1406 = vld [vmem:[%s1400 + $0x14] sm:$0xf]
  %v1407 = vld [vmem:[%s1400 + $0x18] sm:$0xf]
  %v1408 = vld [vmem:[%s1400 + $0x1c] sm:$0xf]
  %v1409 = vld [vmem:[%s1400 + $0x20] sm:$0xf]
  %v1410 = vld [vmem:[%s1400 + $0x24] sm:$0xf]
  %v1411 = vld [vmem:[%s1400 + $0x28] sm:$0xf]
  %v1412 = vld [vmem:[%s1400 + $0x2c] sm:$0xf]
  %v1413 = vld [vmem:[%s1400 + $0x30] sm:$0xf]
  %v1414 = vld [vmem:[%s1400 + $0x34] sm:$0xf]
  %v1415 = vld [vmem:[%s1400 + $0x38] sm:$0xf]
  %v1416 = vld [vmem:[%s1400 + $0x3c] sm:$0xf]
  %v1417 = vpack.c.bf16 %v1399, %v1398
  %s1418 = scalar_lea.vmem %s6, 1
  %v1419 = vld [vmem:[%s1418] sm:$0x1]
  %v1421 = vperm.slane %v1419, 0
  %v1439 = vunpack.c.l.b16 %v1401
  %v1440 = vunpack.c.l.b16 %v1402
  %v1441 = vunpack.c.l.b16 %v1403
  %v1442 = vunpack.c.l.b16 %v1404
  %v1443 = vunpack.c.l.b16 %v1405
  %v1444 = vunpack.c.l.b16 %v1406
  %v1445 = vunpack.c.l.b16 %v1407
  %v1446 = vunpack.c.l.b16 %v1408
  %v1447 = vunpack.c.l.b16 %v1409
  %v1448 = vunpack.c.l.b16 %v1410
  %v1449 = vunpack.c.l.b16 %v1411
  %v1450 = vunpack.c.l.b16 %v1412
  %v1451 = vunpack.c.l.b16 %v1413
  %v1452 = vunpack.c.l.b16 %v1414
  %v1453 = vunpack.c.l.b16 %v1415
  %v1454 = vunpack.c.l.b16 %v1416
  %v1455 = vpack.c.b16 %v1440, %v1439
  %v1456 = vpack.c.b16 %v1442, %v1441
  %v1457 = vpack.c.b16 %v1444, %v1443
  %v1458 = vpack.c.b16 %v1446, %v1445
  %v1459 = vpack.c.b16 %v1448, %v1447
  %v1460 = vpack.c.b16 %v1450, %v1449
  %v1461 = vpack.c.b16 %v1452, %v1451
  %v1462 = vpack.c.b16 %v1454, %v1453
  %1471 = vmatpush.bf16.msra.mxu0 %v1462
  %1472 = vmatpush.bf16.msra.mxu0 %v1461
  %1473 = vmatpush.bf16.msra.mxu0 %v1460
  %1474 = vmatpush.bf16.msra.mxu0 %v1459
  %1475 = vmatpush.bf16.msra.mxu0 %v1458
  %1476 = vmatpush.bf16.msra.mxu0 %v1457
  %1477 = vmatpush.bf16.msra.mxu0 %v1456
  %1478 = vmatpush.bf16.msra.mxu0 %v1455
  %1479 = vmatmul.bf16.gmra.mxu0 %v1417
  %v1480 = vpop.f32.mrf.mxu0
  %v1481 = vadd.f32 %v1421, %v1480
  %v1482 = vpop.f32.mrf.mxu0
  %v1483 = vadd.f32 %v1421, %v1482
  %1484 = vdwg.mxu0
  %v1485 = vadd.f32 %v1045, %v1481
  %v1486 = vadd.f32 %v1046, %v1483
  %s1487 = scalar_lea.vmem %s7, 1
  %v1488 = vld [vmem:[%s1487] sm:$0x1]
  %s1489 = scalar_lea.vmem %s8, 1
  %v1490 = vld [vmem:[%s1489] sm:$0x1]
  %1491 = vadd.xlane.f32.xlu0 %v1485
  %v1492 = vpop.xlane.xlu0 %1491
  %1493 = vadd.xlane.f32.xlu0 %v1486
  %v1494 = vpop.xlane.xlu0 %1493
  %v1495 = vmul.f32 %v1492, %v649
  %v1496 = vmul.f32 %v1494, %v649
  %v1497 = vsub.f32 %v1485, %v1495
  %v1498 = vsub.f32 %v1486, %v1496
  %v1499 = vmul.f32 %v1497, %v1497
  %v1500 = vmul.f32 %v1498, %v1498
  %1501 = vadd.xlane.f32.xlu0 %v1499
  %v1502 = vpop.xlane.xlu0 %1501
  %1503 = vadd.xlane.f32.xlu0 %v1500
  %v1504 = vpop.xlane.xlu0 %1503
  %v1505 = vmul.f32 %v1502, %v649
  %v1506 = vmul.f32 %v1504, %v649
  %v1507 = vadd.f32 %v1505, 1e-05
  %v1508 = vadd.f32 %v1506, 1e-05
  %v1509 = vrsqrt.pop %v1507
  %v1510 = vmul.f32 %v1509, %v1507
  %v1511 = vmul.f32 %v1510, %v1509
  %v1512 = vmul.f32 0.5, %v1511
  %v1513 = vsub.f32 1.5, %v1512
  %v1514 = vmul.f32 %v1509, %v1513
  %vm1515 = vweird.f32 %v1507
  %vm1516 = vweird.f32 %v1509
  %vm1517 = vmor %vm1515, %vm1516
  %v1518 = vsel %vm1517, %v1509, %v1514
  %v1519 = vrsqrt.pop %v1508
  %v1520 = vmul.f32 %v1519, %v1508
  %v1521 = vmul.f32 %v1520, %v1519
  %v1522 = vmul.f32 0.5, %v1521
  %v1523 = vsub.f32 1.5, %v1522
  %v1524 = vmul.f32 %v1519, %v1523
  %vm1525 = vweird.f32 %v1508
  %vm1526 = vweird.f32 %v1519
  %vm1527 = vmor %vm1525, %vm1526
  %v1528 = vsel %vm1527, %v1519, %v1524
  %v1529 = vmul.f32 %v1497, %v1518
  %v1530 = vmul.f32 %v1498, %v1528
  %v1532 = vperm.slane %v1488, 0
  %v1534 = vmul.f32 %v1529, %v1532
  %v1535 = vmul.f32 %v1530, %v1532
  %v1537 = vperm.slane %v1490, 0
  %v1539 = vadd.f32 %v1534, %v1537
  %v1540 = vadd.f32 %v1535, %v1537
  %s1541 = scalar_lea.vmem %s9, 128
  %v1542 = vld [vmem:[%s1541] sm:$0xff]
  %v1543 = vld [vmem:[%s1541 + $0x8] sm:$0xff]
  %v1544 = vld [vmem:[%s1541 + $0x10] sm:$0xff]
  %v1545 = vld [vmem:[%s1541 + $0x18] sm:$0xff]
  %v1546 = vld [vmem:[%s1541 + $0x20] sm:$0xff]
  %v1547 = vld [vmem:[%s1541 + $0x28] sm:$0xff]
  %v1548 = vld [vmem:[%s1541 + $0x30] sm:$0xff]
  %v1549 = vld [vmem:[%s1541 + $0x38] sm:$0xff]
  %v1550 = vld [vmem:[%s1541 + $0x40] sm:$0xff]
  %v1551 = vld [vmem:[%s1541 + $0x48] sm:$0xff]
  %v1552 = vld [vmem:[%s1541 + $0x50] sm:$0xff]
  %v1553 = vld [vmem:[%s1541 + $0x58] sm:$0xff]
  %v1554 = vld [vmem:[%s1541 + $0x60] sm:$0xff]
  %v1555 = vld [vmem:[%s1541 + $0x68] sm:$0xff]
  %v1556 = vld [vmem:[%s1541 + $0x70] sm:$0xff]
  %v1557 = vld [vmem:[%s1541 + $0x78] sm:$0xff]
  %v1558 = vpack.c.bf16 %v1540, %v1539
  %s1559 = scalar_lea.vmem %s10, 2
  %v1560 = vld [vmem:[%s1559] sm:$0x3]
  %v1562 = vperm.slane %v1560, 0
  %v1563 = vperm.slane %v1560, 1
  %v1582 = vunpack.c.l.b16 %v1542
  %v1583 = vunpack.c.h.b16 %v1542
  %v1584 = vunpack.c.l.b16 %v1543
  %v1585 = vunpack.c.h.b16 %v1543
  %v1586 = vunpack.c.l.b16 %v1544
  %v1587 = vunpack.c.h.b16 %v1544
  %v1588 = vunpack.c.l.b16 %v1545
  %v1589 = vunpack.c.h.b16 %v1545
  %v1590 = vunpack.c.l.b16 %v1546
  %v1591 = vunpack.c.h.b16 %v1546
  %v1592 = vunpack.c.l.b16 %v1547
  %v1593 = vunpack.c.h.b16 %v1547
  %v1594 = vunpack.c.l.b16 %v1548
  %v1595 = vunpack.c.h.b16 %v1548
  %v1596 = vunpack.c.l.b16 %v1549
  %v1597 = vunpack.c.h.b16 %v1549
  %v1598 = vunpack.c.l.b16 %v1550
  %v1599 = vunpack.c.h.b16 %v1550
  %v1600 = vunpack.c.l.b16 %v1551
  %v1601 = vunpack.c.h.b16 %v1551
  %v1602 = vunpack.c.l.b16 %v1552
  %v1603 = vunpack.c.h.b16 %v1552
  %v1604 = vunpack.c.l.b16 %v1553
  %v1605 = vunpack.c.h.b16 %v1553
  %v1606 = vunpack.c.l.b16 %v1554
  %v1607 = vunpack.c.h.b16 %v1554
  %v1608 = vunpack.c.l.b16 %v1555
  %v1609 = vunpack.c.h.b16 %v1555
  %v1610 = vunpack.c.l.b16 %v1556
  %v1611 = vunpack.c.h.b16 %v1556
  %v1612 = vunpack.c.l.b16 %v1557
  %v1613 = vunpack.c.h.b16 %v1557
  %v1614 = vpack.c.b16 %v1584, %v1582
  %v1615 = vpack.c.b16 %v1585, %v1583
  %v1616 = vpack.c.b16 %v1588, %v1586
  %v1617 = vpack.c.b16 %v1589, %v1587
  %v1618 = vpack.c.b16 %v1592, %v1590
  %v1619 = vpack.c.b16 %v1593, %v1591
  %v1620 = vpack.c.b16 %v1596, %v1594
  %v1621 = vpack.c.b16 %v1597, %v1595
  %v1622 = vpack.c.b16 %v1600, %v1598
  %v1623 = vpack.c.b16 %v1601, %v1599
  %v1624 = vpack.c.b16 %v1604, %v1602
  %v1625 = vpack.c.b16 %v1605, %v1603
  %v1626 = vpack.c.b16 %v1608, %v1606
  %v1627 = vpack.c.b16 %v1609, %v1607
  %v1628 = vpack.c.b16 %v1612, %v1610
  %v1629 = vpack.c.b16 %v1613, %v1611
  %1646 = vmatpush.bf16.msra.mxu0 %v1628
  %1647 = vmatpush.bf16.msra.mxu0 %v1626
  %1648 = vmatpush.bf16.msra.mxu0 %v1624
  %1649 = vmatpush.bf16.msra.mxu0 %v1622
  %1650 = vmatpush.bf16.msra.mxu0 %v1620
  %1651 = vmatpush.bf16.msra.mxu0 %v1618
  %1652 = vmatpush.bf16.msra.mxu0 %v1616
  %1653 = vmatpush.bf16.msra.mxu0 %v1614
  %1654 = vmatmul.bf16.gmra.mxu0 %v1558
  %v1655 = vpop.f32.mrf.mxu0
  %v1656 = vadd.f32 %v1562, %v1655
  %v1657 = vpop.f32.mrf.mxu0
  %v1658 = vadd.f32 %v1562, %v1657
  %1659 = vdwg.mxu0
  %1660 = vmatpush.bf16.msra.mxu0 %v1629
  %1661 = vmatpush.bf16.msra.mxu0 %v1627
  %1662 = vmatpush.bf16.msra.mxu0 %v1625
  %1663 = vmatpush.bf16.msra.mxu0 %v1623
  %1664 = vmatpush.bf16.msra.mxu0 %v1621
  %1665 = vmatpush.bf16.msra.mxu0 %v1619
  %1666 = vmatpush.bf16.msra.mxu0 %v1617
  %1667 = vmatpush.bf16.msra.mxu0 %v1615
  %1668 = vmatmul.bf16.gmra.mxu0 %v1558
  %v1669 = vpop.f32.mrf.mxu0
  %v1670 = vadd.f32 %v1563, %v1669
  %v1671 = vpop.f32.mrf.mxu0
  %v1672 = vadd.f32 %v1563, %v1671
  %1673 = vdwg.mxu0
  %v1674 = vmax.f32 %v1656, 0.0
  %v1675 = vmax.f32 %v1670, 0.0
  %v1676 = vmax.f32 %v1658, 0.0
  %v1677 = vmax.f32 %v1672, 0.0
  %s1678 = scalar_lea.vmem %s11, 128
  %v1679 = vld [vmem:[%s1678] sm:$0xf]
  %v1680 = vld [vmem:[%s1678 + $0x4] sm:$0xf]
  %v1681 = vld [vmem:[%s1678 + $0x8] sm:$0xf]
  %v1682 = vld [vmem:[%s1678 + $0xc] sm:$0xf]
  %v1683 = vld [vmem:[%s1678 + $0x10] sm:$0xf]
  %v1684 = vld [vmem:[%s1678 + $0x14] sm:$0xf]
  %v1685 = vld [vmem:[%s1678 + $0x18] sm:$0xf]
  %v1686 = vld [vmem:[%s1678 + $0x1c] sm:$0xf]
  %v1687 = vld [vmem:[%s1678 + $0x20] sm:$0xf]
  %v1688 = vld [vmem:[%s1678 + $0x24] sm:$0xf]
  %v1689 = vld [vmem:[%s1678 + $0x28] sm:$0xf]
  %v1690 = vld [vmem:[%s1678 + $0x2c] sm:$0xf]
  %v1691 = vld [vmem:[%s1678 + $0x30] sm:$0xf]
  %v1692 = vld [vmem:[%s1678 + $0x34] sm:$0xf]
  %v1693 = vld [vmem:[%s1678 + $0x38] sm:$0xf]
  %v1694 = vld [vmem:[%s1678 + $0x3c] sm:$0xf]
  %v1695 = vld [vmem:[%s1678 + $0x40] sm:$0xf]
  %v1696 = vld [vmem:[%s1678 + $0x44] sm:$0xf]
  %v1697 = vld [vmem:[%s1678 + $0x48] sm:$0xf]
  %v1698 = vld [vmem:[%s1678 + $0x4c] sm:$0xf]
  %v1699 = vld [vmem:[%s1678 + $0x50] sm:$0xf]
  %v1700 = vld [vmem:[%s1678 + $0x54] sm:$0xf]
  %v1701 = vld [vmem:[%s1678 + $0x58] sm:$0xf]
  %v1702 = vld [vmem:[%s1678 + $0x5c] sm:$0xf]
  %v1703 = vld [vmem:[%s1678 + $0x60] sm:$0xf]
  %v1704 = vld [vmem:[%s1678 + $0x64] sm:$0xf]
  %v1705 = vld [vmem:[%s1678 + $0x68] sm:$0xf]
  %v1706 = vld [vmem:[%s1678 + $0x6c] sm:$0xf]
  %v1707 = vld [vmem:[%s1678 + $0x70] sm:$0xf]
  %v1708 = vld [vmem:[%s1678 + $0x74] sm:$0xf]
  %v1709 = vld [vmem:[%s1678 + $0x78] sm:$0xf]
  %v1710 = vld [vmem:[%s1678 + $0x7c] sm:$0xf]
  %v1711 = vpack.c.bf16 %v1676, %v1674
  %v1712 = vpack.c.bf16 %v1677, %v1675
  %s1713 = scalar_lea.vmem %s12, 1
  %v1714 = vld [vmem:[%s1713] sm:$0x1]
  %v1716 = vperm.slane %v1714, 0
  %v1750 = vunpack.c.l.b16 %v1679
  %v1751 = vunpack.c.l.b16 %v1680
  %v1752 = vunpack.c.l.b16 %v1681
  %v1753 = vunpack.c.l.b16 %v1682
  %v1754 = vunpack.c.l.b16 %v1683
  %v1755 = vunpack.c.l.b16 %v1684
  %v1756 = vunpack.c.l.b16 %v1685
  %v1757 = vunpack.c.l.b16 %v1686
  %v1758 = vunpack.c.l.b16 %v1687
  %v1759 = vunpack.c.l.b16 %v1688
  %v1760 = vunpack.c.l.b16 %v1689
  %v1761 = vunpack.c.l.b16 %v1690
  %v1762 = vunpack.c.l.b16 %v1691
  %v1763 = vunpack.c.l.b16 %v1692
  %v1764 = vunpack.c.l.b16 %v1693
  %v1765 = vunpack.c.l.b16 %v1694
  %v1766 = vunpack.c.l.b16 %v1695
  %v1767 = vunpack.c.l.b16 %v1696
  %v1768 = vunpack.c.l.b16 %v1697
  %v1769 = vunpack.c.l.b16 %v1698
  %v1770 = vunpack.c.l.b16 %v1699
  %v1771 = vunpack.c.l.b16 %v1700
  %v1772 = vunpack.c.l.b16 %v1701
  %v1773 = vunpack.c.l.b16 %v1702
  %v1774 = vunpack.c.l.b16 %v1703
  %v1775 = vunpack.c.l.b16 %v1704
  %v1776 = vunpack.c.l.b16 %v1705
  %v1777 = vunpack.c.l.b16 %v1706
  %v1778 = vunpack.c.l.b16 %v1707
  %v1779 = vunpack.c.l.b16 %v1708
  %v1780 = vunpack.c.l.b16 %v1709
  %v1781 = vunpack.c.l.b16 %v1710
  %v1782 = vpack.c.b16 %v1751, %v1750
  %v1783 = vpack.c.b16 %v1753, %v1752
  %v1784 = vpack.c.b16 %v1755, %v1754
  %v1785 = vpack.c.b16 %v1757, %v1756
  %v1786 = vpack.c.b16 %v1759, %v1758
  %v1787 = vpack.c.b16 %v1761, %v1760
  %v1788 = vpack.c.b16 %v1763, %v1762
  %v1789 = vpack.c.b16 %v1765, %v1764
  %v1790 = vpack.c.b16 %v1767, %v1766
  %v1791 = vpack.c.b16 %v1769, %v1768
  %v1792 = vpack.c.b16 %v1771, %v1770
  %v1793 = vpack.c.b16 %v1773, %v1772
  %v1794 = vpack.c.b16 %v1775, %v1774
  %v1795 = vpack.c.b16 %v1777, %v1776
  %v1796 = vpack.c.b16 %v1779, %v1778
  %v1797 = vpack.c.b16 %v1781, %v1780
  %1814 = vmatpush.bf16.msra.mxu0 %v1789
  %1815 = vmatpush.bf16.msra.mxu0 %v1788
  %1816 = vmatpush.bf16.msra.mxu0 %v1787
  %1817 = vmatpush.bf16.msra.mxu0 %v1786
  %1818 = vmatpush.bf16.msra.mxu0 %v1785
  %1819 = vmatpush.bf16.msra.mxu0 %v1784
  %1820 = vmatpush.bf16.msra.mxu0 %v1783
  %1821 = vmatpush.bf16.msra.mxu0 %v1782
  %1822 = vmatmul.bf16.gmra.mxu0 %v1711
  %v1823 = vpop.f32.mrf.mxu0
  %v1824 = vadd.f32 %v1716, %v1823
  %v1825 = vpop.f32.mrf.mxu0
  %v1826 = vadd.f32 %v1716, %v1825
  %1827 = vdwg.mxu0
  %1828 = vmatpush.bf16.msra.mxu0 %v1797
  %1829 = vmatpush.bf16.msra.mxu0 %v1796
  %1830 = vmatpush.bf16.msra.mxu0 %v1795
  %1831 = vmatpush.bf16.msra.mxu0 %v1794
  %1832 = vmatpush.bf16.msra.mxu0 %v1793
  %1833 = vmatpush.bf16.msra.mxu0 %v1792
  %1834 = vmatpush.bf16.msra.mxu0 %v1791
  %1835 = vmatpush.bf16.msra.mxu0 %v1790
  %1836 = vmatmul.bf16.gmra.mxu0 %v1712
  %v1837 = vpop.f32.mrf.mxu0
  %v1838 = vadd.f32 %v1824, %v1837
  %v1839 = vpop.f32.mrf.mxu0
  %v1840 = vadd.f32 %v1826, %v1839
  %1841 = vdwg.mxu0
  %v1842 = vadd.f32 %v1539, %v1838
  %v1843 = vadd.f32 %v1540, %v1840
  %s1844 = scalar_lea.vmem %s13, 1
  %v1845 = vld [vmem:[%s1844] sm:$0x1]
  %s1846 = scalar_lea.vmem %s14, 1
  %v1847 = vld [vmem:[%s1846] sm:$0x1]
  %1848 = vadd.xlane.f32.xlu0 %v1842
  %v1849 = vpop.xlane.xlu0 %1848
  %1850 = vadd.xlane.f32.xlu0 %v1843
  %v1851 = vpop.xlane.xlu0 %1850
  %v1852 = vmul.f32 %v1849, %v649
  %v1853 = vmul.f32 %v1851, %v649
  %v1854 = vsub.f32 %v1842, %v1852
  %v1855 = vsub.f32 %v1843, %v1853
  %v1856 = vmul.f32 %v1854, %v1854
  %v1857 = vmul.f32 %v1855, %v1855
  %1858 = vadd.xlane.f32.xlu0 %v1856
  %v1859 = vpop.xlane.xlu0 %1858
  %1860 = vadd.xlane.f32.xlu0 %v1857
  %v1861 = vpop.xlane.xlu0 %1860
  %v1862 = vmul.f32 %v1859, %v649
  %v1863 = vmul.f32 %v1861, %v649
  %v1864 = vadd.f32 %v1862, 1e-05
  %v1865 = vadd.f32 %v1863, 1e-05
  %v1866 = vrsqrt.pop %v1864
  %v1867 = vmul.f32 %v1866, %v1864
  %v1868 = vmul.f32 %v1867, %v1866
  %v1869 = vmul.f32 0.5, %v1868
  %v1870 = vsub.f32 1.5, %v1869
  %v1871 = vmul.f32 %v1866, %v1870
  %vm1872 = vweird.f32 %v1864
  %vm1873 = vweird.f32 %v1866
  %vm1874 = vmor %vm1872, %vm1873
  %v1875 = vsel %vm1874, %v1866, %v1871
  %v1876 = vrsqrt.pop %v1865
  %v1877 = vmul.f32 %v1876, %v1865
  %v1878 = vmul.f32 %v1877, %v1876
  %v1879 = vmul.f32 0.5, %v1878
  %v1880 = vsub.f32 1.5, %v1879
  %v1881 = vmul.f32 %v1876, %v1880
  %vm1882 = vweird.f32 %v1865
  %vm1883 = vweird.f32 %v1876
  %vm1884 = vmor %vm1882, %vm1883
  %v1885 = vsel %vm1884, %v1876, %v1881
  %v1886 = vmul.f32 %v1854, %v1875
  %v1887 = vmul.f32 %v1855, %v1885
  %v1889 = vperm.slane %v1845, 0
  %v1891 = vmul.f32 %v1886, %v1889
  %v1892 = vmul.f32 %v1887, %v1889
  %v1894 = vperm.slane %v1847, 0
  %v1896 = vadd.f32 %v1891, %v1894
  %v1897 = vadd.f32 %v1892, %v1894
  %v1898 = vrot.slane %v1896, 4
  %v1899 = vadd.f32 %v1896, %v1898
  %v1900 = vrot.slane %v1899, 2
  %v1901 = vadd.f32 %v1899, %v1900
  %v1902 = vrot.slane %v1901, 1
  %v1903 = vadd.f32 %v1901, %v1902
  %v1904 = vrot.slane %v1897, 4
  %v1905 = vadd.f32 %v1897, %v1904
  %v1906 = vrot.slane %v1905, 2
  %v1907 = vadd.f32 %v1905, %v1906
  %v1908 = vrot.slane %v1907, 1
  %v1909 = vadd.f32 %v1907, %v1908
  %v1910 = vrcp.pop 8.0
  %v1911 = vmul.f32 8.0, %v1910
  %v1912 = vsub.f32 1.0, %v1911
  %v1913 = vmul.f32 %v1910, %v1912
  %v1914 = vadd.f32 %v1910, %v1913
  %vm1915 = vweird.f32 %v1910
  %v1916 = vsel %vm1915, %v1910, %v1914
  %v1917 = vmul.f32 %v1903, %v1916
  %v1918 = vmul.f32 %v1909, %v1916
  %v1919 = vld [vmem:[%s15] sm:$0x1]
  %v1920 = vld [vmem:[%s16] sm:$0x1]
  %vm1923 = vcmask 1041409
  %v1924 = vsel %vm1923, %v1918, %v1917
  %vm1926 = vcmask 1041408
  %v1927 = vsel %vm1926, %v1924, 0.0
  %1928 = vadd.xlane.f32.xlu0 %v1927
  %v1929 = vpop.xlane.xlu0 %1928
  %v1930 = vmul.f32 %v1929, %v649
  %v1932 = vrot.slane %v1930, 1
  %v1935 = vsub.f32 %v1917, %v1930
  %v1936 = vsub.f32 %v1918, %v1932
  %v1937 = vmul.f32 %v1935, %v1935
  %v1938 = vmul.f32 %v1936, %v1936
  %v1941 = vrot.slane %v1938, 7
  %v1942 = vsel %vm1923, %v1941, %v1937
  %v1944 = vsel %vm1926, %v1942, 0.0
  %1945 = vadd.xlane.f32.xlu0 %v1944
  %v1946 = vpop.xlane.xlu0 %1945
  %v1947 = vmul.f32 %v1946, %v649
  %v1948 = vadd.f32 %v1947, 1e-05
  %v1949 = vrsqrt.pop %v1948
  %v1950 = vmul.f32 %v1949, %v1948
  %v1951 = vmul.f32 %v1950, %v1949
  %v1952 = vmul.f32 0.5, %v1951
  %v1953 = vsub.f32 1.5, %v1952
  %v1954 = vmul.f32 %v1949, %v1953
  %vm1955 = vweird.f32 %v1948
  %vm1956 = vweird.f32 %v1949
  %vm1957 = vmor %vm1955, %vm1956
  %v1958 = vsel %vm1957, %v1949, %v1954
  %v1960 = vrot.slane %v1958, 1
  %v1963 = vmul.f32 %v1935, %v1958
  %v1964 = vmul.f32 %v1936, %v1960
  %v1966 = vperm.slane %v1919, 0
  %v1968 = vmul.f32 %v1963, %v1966
  %v1969 = vmul.f32 %v1964, %v1966
  %v1971 = vperm.slane %v1920, 0
  %v1973 = vadd.f32 %v1968, %v1971
  %v1974 = vadd.f32 %v1969, %v1971
  %v1977 = vrot.slane %v1974, 7
  %v1978 = vsel %vm1923, %v1977, %v1973
  %1980 = vst [vmem:[%s21] sm:$0x3] %v1978
  // Predicated region
  $region86: #{pallas_forward.1} parent=0 // pred_check
    _
  $region87: #{pallas_forward.1} parent=0 // pred_check_branch
    %1982 = sbr.rel (0) target = $region89
  $region88: #{pallas_forward.1} parent=0 // pred_region
    _
  $region89: #{pallas_forward.1} parent=0 // pred_fallthru
    _
  // Predicated region
  $region90: #{pallas_forward.1} parent=0 // pred_check
    _
  $region91: #{pallas_forward.1} parent=0 // pred_check_branch
    %1984 = sbr.rel (0) target = $region93
  $region92: #{pallas_forward.1} parent=0 // pred_region
    _
  $region93: #{pallas_forward.1} parent=0 // pred_fallthru
    _

</llo_original>
